<compile_context>
chip_gen: v7x
topology: tpu7x:2x2x1
jax: 0.10.0
libtpu: 0.0.40
codegen_flags: <defaults>
</compile_context>

<pallas_src>
import jax
import jax.numpy as jnp
from jax import lax
from jax.experimental import pallas as pl
from jax.experimental.pallas import tpu as pltpu


def cnn_kernel(x_ref, w1_ref, b1_ref, w2_ref, b2_ref,
               wf1_ref, bf1_ref, wf2_ref, bf2_ref, o_ref):
    # x_ref : (100, TB)   flattened (h, w, c) input, batch on lanes
    # w1_ref: (160, 100)  conv1 as a dense linear map (rows = i*40 + j*10 + oc)
    # w2_ref: (3, 80, 30) conv2 dense map split along the pooled-row axis
    x = x_ref[...]                                                   # (100, TB)

    # conv1 (4 -> 10, 2x2) + bias + ReLU: all 16 output positions in ONE matmul.
    y1 = jnp.dot(w1_ref[...], x, preferred_element_type=jnp.float32)
    y1 = jnp.maximum(y1 + b1_ref[...], 0.0)                          # (160, TB)

    # max_pool2d(kernel=2, stride=1) over the 4x4 grid: horizontal then vertical maxima.
    hmax = [jnp.maximum(y1[i * 40:i * 40 + 30, :],
                        y1[i * 40 + 10:i * 40 + 40, :]) for i in range(4)]
    pooled = [jnp.maximum(hmax[i], hmax[i + 1]) for i in range(3)]   # each (30, TB)

    # conv2 (10 -> 20, 2x2) + bias + ReLU: dense map split into 3 K-blocks
    # (one per pooled spatial row) so no sublane concatenation is needed.
    acc = jnp.dot(w2_ref[0], pooled[0], preferred_element_type=jnp.float32)
    acc = acc + jnp.dot(w2_ref[1], pooled[1], preferred_element_type=jnp.float32)
    acc = acc + jnp.dot(w2_ref[2], pooled[2], preferred_element_type=jnp.float32)
    y2 = jnp.maximum(acc + b2_ref[...], 0.0)                         # (80, TB), torch-flatten row order

    # fc1 (80 -> 60) + ReLU
    h = jnp.dot(wf1_ref[...], y2, preferred_element_type=jnp.float32)
    h = jnp.maximum(h + bf1_ref[...], 0.0)                           # (60, TB)

    # fc2 (60 -> 40) + log_softmax over features (axis 0 in this layout)
    logits = jnp.dot(wf2_ref[...], h, preferred_element_type=jnp.float32) + bf2_ref[...]
    m = jnp.max(logits, axis=0, keepdims=True)
    z = logits - m
    lse = jnp.log(jnp.sum(jnp.exp(z), axis=0, keepdims=True))
    o_ref[...] = (z - lse).astype(o_ref.dtype)


def _densify_params(params):
    """Host-side layout plumbing: express the tiny 2x2 convs as dense linear maps
    (zero-filled) so the kernel runs one big MXU matmul per layer.  No arithmetic
    is performed on the weight values themselves."""
    w1, b1, w2, b2, wf1, bf1, wf2, bf2 = params   # PyTorch layouts

    # conv1: (10,4,2,2) -> dense (160, 100); rows (i, j, oc), cols (h, w, ic).
    w1d = jnp.zeros((4, 4, 10, 5, 5, 4), jnp.float32)
    for dy in range(2):
        for dx in range(2):
            sy = jnp.eye(4, 5, k=dy, dtype=jnp.float32)   # [i, i+dy] = 1
            sx = jnp.eye(4, 5, k=dx, dtype=jnp.float32)
            w1d = w1d + jnp.einsum('ih,jw,oc->ijohwc', sy, sx, w1[:, :, dy, dx])
    w1d = w1d.reshape(160, 100)
    b1d = jnp.tile(b1, 16).reshape(160, 1)

    # conv2: (20,10,2,2) -> dense (80, 90); rows follow the PyTorch flatten order
    # (oc*4 + oi*2 + oj) so fc1's weight is used unchanged.  Split into 3 blocks of
    # 30 columns, one per pooled spatial row (cols within a block = pj*10 + ic).
    w2d = jnp.zeros((20, 2, 2, 3, 3, 10), jnp.float32)
    for dy in range(2):
        for dx in range(2):
            sy = jnp.eye(2, 3, k=dy, dtype=jnp.float32)
            sx = jnp.eye(2, 3, k=dx, dtype=jnp.float32)
            w2d = w2d + jnp.einsum('ip,jq,oc->oijpqc', sy, sx, w2[:, :, dy, dx])
    w2d = w2d.reshape(80, 3, 30).transpose(1, 0, 2)        # (3, 80, 30)
    b2d = jnp.repeat(b2, 4).reshape(80, 1)

    return (w1d, b1d, w2d, b2d,
            wf1.astype(jnp.float32), bf1.reshape(60, 1).astype(jnp.float32),
            wf2.astype(jnp.float32), bf2.reshape(40, 1).astype(jnp.float32))


def cnn_forward(x, params, *, block_b=128):
    """x: (B, 4, 5, 5) float32 (PyTorch NCHW). Returns (B, 40) log-probabilities.

    block_b is the lane-dense batch tile (multiple of 128); raise it (256-1024)
    for large batches to amortize the ~0.35 us per-grid-step overhead."""
    B = x.shape[0]
    TB = block_b
    n_blocks = -(-B // TB)
    Bp = n_blocks * TB
    if Bp != B:
        x = jnp.pad(x, ((0, Bp - B), (0, 0), (0, 0), (0, 0)))
    # NCHW -> (H, W, C, B) -> (100, Bp): batch on the lane (last) axis.
    x_t = jnp.transpose(x, (2, 3, 1, 0)).reshape(100, Bp).astype(jnp.float32)

    w1d, b1d, w2d, b2d, wf1k, bf1k, wf2k, bf2k = _densify_params(params)

    flops_per_sample = 2 * (160 * 100 + 80 * 90 + 60 * 80 + 40 * 60)
    bytes_weights = 4 * (160 * 100 + 160 + 3 * 80 * 30 + 80 + 60 * 80 + 60 + 40 * 60 + 40)
    cost = pl.CostEstimate(
        flops=flops_per_sample * Bp,
        transcendentals=41 * Bp,
        bytes_accessed=4 * (100 + 40) * Bp + bytes_weights)

    out_t = pl.pallas_call(
        cnn_kernel,
        out_shape=jax.ShapeDtypeStruct((40, Bp), jnp.float32),
        grid_spec=pltpu.PrefetchScalarGridSpec(
            num_scalar_prefetch=0,
            grid=(n_blocks,),
            in_specs=[
                pl.BlockSpec((100, TB), lambda i: (0, i)),        # x tile (pipelined)
                pl.BlockSpec((160, 100), lambda i: (0, 0)),       # conv1 dense W (resident)
                pl.BlockSpec((160, 1), lambda i: (0, 0)),         # conv1 bias rows
                pl.BlockSpec((3, 80, 30), lambda i: (0, 0, 0)),   # conv2 dense W blocks
                pl.BlockSpec((80, 1), lambda i: (0, 0)),          # conv2 bias rows
                pl.BlockSpec((60, 80), lambda i: (0, 0)),         # fc1 W
                pl.BlockSpec((60, 1), lambda i: (0, 0)),          # fc1 b
                pl.BlockSpec((40, 60), lambda i: (0, 0)),         # fc2 W
                pl.BlockSpec((40, 1), lambda i: (0, 0)),          # fc2 b
            ],
            out_specs=pl.BlockSpec((40, TB), lambda i: (0, i)),
        ),
        compiler_params=pltpu.CompilerParams(
            dimension_semantics=("parallel",)),
        cost_estimate=cost,
    )(x_t, w1d, b1d, w2d, b2d, wf1k, bf1k, wf2k, bf2k)

    return jnp.transpose(out_t)[:B]                               # (B, 40)


def init_params(key):
    """Deterministic init mimicking PyTorch's uniform(-1/sqrt(fan_in), 1/sqrt(fan_in))."""
    ks = jax.random.split(key, 8)

    def u(k, shape, fan_in):
        bound = 1.0 / jnp.sqrt(float(fan_in))
        return jax.random.uniform(k, shape, jnp.float32, -bound, bound)

    w1 = u(ks[0], (10, 4, 2, 2), 4 * 2 * 2)
    b1 = u(ks[1], (10,), 4 * 2 * 2)
    w2 = u(ks[2], (20, 10, 2, 2), 10 * 2 * 2)
    b2 = u(ks[3], (20,), 10 * 2 * 2)
    wf1 = u(ks[4], (60, 80), 80)
    bf1 = u(ks[5], (60,), 80)
    wf2 = u(ks[6], (40, 60), 60)
    bf2 = u(ks[7], (40,), 60)
    return (w1, b1, w2, b2, wf1, bf1, wf2, bf2)


def reference_forward(x, params):
    """Pure-JAX mirror of the PyTorch CNN.forward (independent code path)."""
    w1, b1, w2, b2, wf1, bf1, wf2, bf2 = params
    dn = ('NCHW', 'OIHW', 'NCHW')
    hi = lax.Precision.HIGHEST
    y = lax.conv_general_dilated(x, w1, (1, 1), 'VALID',
                                 dimension_numbers=dn, precision=hi)
    y = jnp.maximum(y + b1.reshape(1, -1, 1, 1), 0.0)
    # max_pool2d(kernel=2, stride=1)
    y = jnp.maximum(jnp.maximum(y[:, :, :-1, :-1], y[:, :, :-1, 1:]),
                    jnp.maximum(y[:, :, 1:, :-1], y[:, :, 1:, 1:]))
    y = lax.conv_general_dilated(y, w2, (1, 1), 'VALID',
                                 dimension_numbers=dn, precision=hi)
    y = jnp.maximum(y + b2.reshape(1, -1, 1, 1), 0.0)
    y = y.reshape(y.shape[0], -1)                                  # (B, 80) like torch .view
    y = jnp.maximum(jnp.dot(y, wf1.T, precision=hi) + bf1, 0.0)
    y = jnp.dot(y, wf2.T, precision=hi) + bf2
    return jax.nn.log_softmax(y, axis=1)


if __name__ == "__main__":
    key = jax.random.PRNGKey(0)
    kx, kp = jax.random.split(key)
    batch = 200                    # not a tile multiple: exercises padding + a 2-step grid
    x = jax.random.normal(kx, (batch, 4, 5, 5), jnp.float32)
    params = init_params(kp)

    out = jax.jit(cnn_forward)(x, params)
    out = jax.block_until_ready(out)

    ref = reference_forward(x, params)
    assert out.shape == (batch, 40)
    max_err = float(jnp.max(jnp.abs(out - ref)))
    assert jnp.allclose(out, ref, atol=1e-4, rtol=1e-4), f"max abs err {max_err}"

    print("KERNEL_OK")
</pallas_src>

<mosaic_0001>
module attributes {stable_mosaic.version = 11 : i64} {
  func.func @cnn_kernel(%arg0: i32, %arg1: memref<100x128xf32, #tpu.memory_space<vmem>>, %arg2: memref<160x100xf32, #tpu.memory_space<vmem>>, %arg3: memref<160x1xf32, #tpu.memory_space<vmem>>, %arg4: memref<3x80x30xf32, #tpu.memory_space<vmem>>, %arg5: memref<80x1xf32, #tpu.memory_space<vmem>>, %arg6: memref<60x80xf32, #tpu.memory_space<vmem>>, %arg7: memref<60x1xf32, #tpu.memory_space<vmem>>, %arg8: memref<40x60xf32, #tpu.memory_space<vmem>>, %arg9: memref<40x1xf32, #tpu.memory_space<vmem>>, %arg10: memref<40x128xf32, #tpu.memory_space<vmem>>) attributes {dimension_semantics = [#tpu.dimension_semantics<parallel>], iteration_bounds = array<i64: 2>, scalar_prefetch = 0 : i64, scratch_operands = 0 : i64, tpu.core_type = #tpu.core_type<tc>, window_params = [{transform_indices = @transform_0, window_bounds = array<i64: 100, 128>}, {pipeline_mode = #tpu.pipeline_mode<synchronous>, transform_indices = @transform_1, window_bounds = array<i64: 160, 100>}, {pipeline_mode = #tpu.pipeline_mode<synchronous>, transform_indices = @transform_2, window_bounds = array<i64: 160, 1>}, {pipeline_mode = #tpu.pipeline_mode<synchronous>, transform_indices = @transform_3, window_bounds = array<i64: 3, 80, 30>}, {pipeline_mode = #tpu.pipeline_mode<synchronous>, transform_indices = @transform_4, window_bounds = array<i64: 80, 1>}, {pipeline_mode = #tpu.pipeline_mode<synchronous>, transform_indices = @transform_5, window_bounds = array<i64: 60, 80>}, {pipeline_mode = #tpu.pipeline_mode<synchronous>, transform_indices = @transform_6, window_bounds = array<i64: 60, 1>}, {pipeline_mode = #tpu.pipeline_mode<synchronous>, transform_indices = @transform_7, window_bounds = array<i64: 40, 60>}, {pipeline_mode = #tpu.pipeline_mode<synchronous>, transform_indices = @transform_8, window_bounds = array<i64: 40, 1>}, {transform_indices = @transform_9, window_bounds = array<i64: 40, 128>}]} {
    %c0 = arith.constant 0 : index
    %c0_0 = arith.constant 0 : index
    %0 = vector.load %arg1[%c0, %c0_0] : memref<100x128xf32, #tpu.memory_space<vmem>>, vector<100x128xf32>
    %c0_1 = arith.constant 0 : index
    %c0_2 = arith.constant 0 : index
    %1 = vector.load %arg2[%c0_1, %c0_2] : memref<160x100xf32, #tpu.memory_space<vmem>>, vector<160x100xf32>
    %cst = arith.constant dense<0.000000e+00> : vector<160x128xf32>
    %2 = tpu.matmul %1, %0, %cst {dimension_numbers = #tpu.dot_dimension_numbers<[1], [0], [0], [1], [0, 0, 1, 1], [], []>} : vector<160x100xf32>, vector<100x128xf32>, vector<160x128xf32> -> vector<160x128xf32>
    %c0_3 = arith.constant 0 : index
    %c0_4 = arith.constant 0 : index
    %3 = vector.load %arg3[%c0_3, %c0_4] : memref<160x1xf32, #tpu.memory_space<vmem>>, vector<160x1xf32>
    %4 = vector.broadcast %3 : vector<160x1xf32> to vector<160x128xf32>
    %5 = arith.addf %2, %4 : vector<160x128xf32>
    %cst_5 = arith.constant 0.000000e+00 : f32
    %6 = vector.broadcast %cst_5 : f32 to vector<160x128xf32>
    %7 = arith.maximumf %5, %6 : vector<160x128xf32>
    %8 = vector.extract_strided_slice %7 {offsets = [0, 0], sizes = [30, 128], strides = [1, 1]} : vector<160x128xf32> to vector<30x128xf32>
    %9 = vector.extract_strided_slice %7 {offsets = [10, 0], sizes = [30, 128], strides = [1, 1]} : vector<160x128xf32> to vector<30x128xf32>
    %10 = arith.maximumf %8, %9 : vector<30x128xf32>
    %11 = vector.extract_strided_slice %7 {offsets = [40, 0], sizes = [30, 128], strides = [1, 1]} : vector<160x128xf32> to vector<30x128xf32>
    %12 = vector.extract_strided_slice %7 {offsets = [50, 0], sizes = [30, 128], strides = [1, 1]} : vector<160x128xf32> to vector<30x128xf32>
    %13 = arith.maximumf %11, %12 : vector<30x128xf32>
    %14 = vector.extract_strided_slice %7 {offsets = [80, 0], sizes = [30, 128], strides = [1, 1]} : vector<160x128xf32> to vector<30x128xf32>
    %15 = vector.extract_strided_slice %7 {offsets = [90, 0], sizes = [30, 128], strides = [1, 1]} : vector<160x128xf32> to vector<30x128xf32>
    %16 = arith.maximumf %14, %15 : vector<30x128xf32>
    %17 = vector.extract_strided_slice %7 {offsets = [120, 0], sizes = [30, 128], strides = [1, 1]} : vector<160x128xf32> to vector<30x128xf32>
    %18 = vector.extract_strided_slice %7 {offsets = [130, 0], sizes = [30, 128], strides = [1, 1]} : vector<160x128xf32> to vector<30x128xf32>
    %19 = arith.maximumf %17, %18 : vector<30x128xf32>
    %20 = arith.maximumf %10, %13 : vector<30x128xf32>
    %21 = arith.maximumf %13, %16 : vector<30x128xf32>
    %22 = arith.maximumf %16, %19 : vector<30x128xf32>
    %c0_6 = arith.constant 0 : index
    %c0_7 = arith.constant 0 : index
    %c0_8 = arith.constant 0 : index
    %23 = vector.load %arg4[%c0_6, %c0_7, %c0_8] : memref<3x80x30xf32, #tpu.memory_space<vmem>>, vector<1x80x30xf32>
    %24 = vector.shape_cast %23 : vector<1x80x30xf32> to vector<80x30xf32>
    %cst_9 = arith.constant dense<0.000000e+00> : vector<80x128xf32>
    %25 = tpu.matmul %24, %20, %cst_9 {dimension_numbers = #tpu.dot_dimension_numbers<[1], [0], [0], [1], [0, 0, 1, 1], [], []>} : vector<80x30xf32>, vector<30x128xf32>, vector<80x128xf32> -> vector<80x128xf32>
    %c1 = arith.constant 1 : index
    %c0_10 = arith.constant 0 : index
    %c0_11 = arith.constant 0 : index
    %26 = vector.load %arg4[%c1, %c0_10, %c0_11] : memref<3x80x30xf32, #tpu.memory_space<vmem>>, vector<1x80x30xf32>
    %27 = vector.shape_cast %26 : vector<1x80x30xf32> to vector<80x30xf32>
    %cst_12 = arith.constant dense<0.000000e+00> : vector<80x128xf32>
    %28 = tpu.matmul %27, %21, %cst_12 {dimension_numbers = #tpu.dot_dimension_numbers<[1], [0], [0], [1], [0, 0, 1, 1], [], []>} : vector<80x30xf32>, vector<30x128xf32>, vector<80x128xf32> -> vector<80x128xf32>
    %29 = arith.addf %25, %28 : vector<80x128xf32>
    %c2 = arith.constant 2 : index
    %c0_13 = arith.constant 0 : index
    %c0_14 = arith.constant 0 : index
    %30 = vector.load %arg4[%c2, %c0_13, %c0_14] : memref<3x80x30xf32, #tpu.memory_space<vmem>>, vector<1x80x30xf32>
    %31 = vector.shape_cast %30 : vector<1x80x30xf32> to vector<80x30xf32>
    %cst_15 = arith.constant dense<0.000000e+00> : vector<80x128xf32>
    %32 = tpu.matmul %31, %22, %cst_15 {dimension_numbers = #tpu.dot_dimension_numbers<[1], [0], [0], [1], [0, 0, 1, 1], [], []>} : vector<80x30xf32>, vector<30x128xf32>, vector<80x128xf32> -> vector<80x128xf32>
    %33 = arith.addf %29, %32 : vector<80x128xf32>
    %c0_16 = arith.constant 0 : index
    %c0_17 = arith.constant 0 : index
    %34 = vector.load %arg5[%c0_16, %c0_17] : memref<80x1xf32, #tpu.memory_space<vmem>>, vector<80x1xf32>
    %35 = vector.broadcast %34 : vector<80x1xf32> to vector<80x128xf32>
    %36 = arith.addf %33, %35 : vector<80x128xf32>
    %cst_18 = arith.constant 0.000000e+00 : f32
    %37 = vector.broadcast %cst_18 : f32 to vector<80x128xf32>
    %38 = arith.maximumf %36, %37 : vector<80x128xf32>
    %c0_19 = arith.constant 0 : index
    %c0_20 = arith.constant 0 : index
    %39 = vector.load %arg6[%c0_19, %c0_20] : memref<60x80xf32, #tpu.memory_space<vmem>>, vector<60x80xf32>
    %cst_21 = arith.constant dense<0.000000e+00> : vector<60x128xf32>
    %40 = tpu.matmul %39, %38, %cst_21 {dimension_numbers = #tpu.dot_dimension_numbers<[1], [0], [0], [1], [0, 0, 1, 1], [], []>} : vector<60x80xf32>, vector<80x128xf32>, vector<60x128xf32> -> vector<60x128xf32>
    %c0_22 = arith.constant 0 : index
    %c0_23 = arith.constant 0 : index
    %41 = vector.load %arg7[%c0_22, %c0_23] : memref<60x1xf32, #tpu.memory_space<vmem>>, vector<60x1xf32>
    %42 = vector.broadcast %41 : vector<60x1xf32> to vector<60x128xf32>
    %43 = arith.addf %40, %42 : vector<60x128xf32>
    %cst_24 = arith.constant 0.000000e+00 : f32
    %44 = vector.broadcast %cst_24 : f32 to vector<60x128xf32>
    %45 = arith.maximumf %43, %44 : vector<60x128xf32>
    %c0_25 = arith.constant 0 : index
    %c0_26 = arith.constant 0 : index
    %46 = vector.load %arg8[%c0_25, %c0_26] : memref<40x60xf32, #tpu.memory_space<vmem>>, vector<40x60xf32>
    %cst_27 = arith.constant dense<0.000000e+00> : vector<40x128xf32>
    %47 = tpu.matmul %46, %45, %cst_27 {dimension_numbers = #tpu.dot_dimension_numbers<[1], [0], [0], [1], [0, 0, 1, 1], [], []>} : vector<40x60xf32>, vector<60x128xf32>, vector<40x128xf32> -> vector<40x128xf32>
    %c0_28 = arith.constant 0 : index
    %c0_29 = arith.constant 0 : index
    %48 = vector.load %arg9[%c0_28, %c0_29] : memref<40x1xf32, #tpu.memory_space<vmem>>, vector<40x1xf32>
    %49 = vector.broadcast %48 : vector<40x1xf32> to vector<40x128xf32>
    %50 = arith.addf %47, %49 : vector<40x128xf32>
    %cst_30 = arith.constant dense<0xFF800000> : vector<128xf32>
    %51 = vector.multi_reduction <maximumf>, %50, %cst_30 [0] : vector<40x128xf32> to vector<128xf32>
    %52 = vector.shape_cast %51 : vector<128xf32> to vector<1x128xf32>
    %53 = vector.broadcast %52 : vector<1x128xf32> to vector<40x128xf32>
    %54 = arith.subf %50, %53 : vector<40x128xf32>
    %55 = math.exp %54 : vector<40x128xf32>
    %cst_31 = arith.constant dense<0.000000e+00> : vector<128xf32>
    %56 = vector.multi_reduction <add>, %55, %cst_31 [0] : vector<40x128xf32> to vector<128xf32>
    %57 = vector.shape_cast %56 : vector<128xf32> to vector<1x128xf32>
    %58 = math.log %57 : vector<1x128xf32>
    %59 = vector.broadcast %58 : vector<1x128xf32> to vector<40x128xf32>
    %60 = arith.subf %54, %59 : vector<40x128xf32>
    %c0_32 = arith.constant 0 : index
    %c0_33 = arith.constant 0 : index
    %61 = vector.load %arg10[%c0_32, %c0_33] : memref<40x128xf32, #tpu.memory_space<vmem>>, vector<40x128xf32>
    tpu.vector_store %arg10[%c0_32, %c0_33], %60 {strides = array<i32>} : memref<40x128xf32, #tpu.memory_space<vmem>>, vector<40x128xf32>,
    return
  }
  func.func @transform_0(%arg0: i32) -> (i32, i32) {
    %c0_i32 = arith.constant 0 : i32
    %c0_i32_0 = arith.constant 0 : i32
    return %c0_i32, %arg0 : i32, i32
  }
  func.func @transform_1(%arg0: i32) -> (i32, i32) {
    %c0_i32 = arith.constant 0 : i32
    %c0_i32_0 = arith.constant 0 : i32
    %c0_i32_1 = arith.constant 0 : i32
    return %c0_i32, %c0_i32_0 : i32, i32
  }
  func.func @transform_2(%arg0: i32) -> (i32, i32) {
    %c0_i32 = arith.constant 0 : i32
    %c0_i32_0 = arith.constant 0 : i32
    %c0_i32_1 = arith.constant 0 : i32
    return %c0_i32, %c0_i32_0 : i32, i32
  }
  func.func @transform_3(%arg0: i32) -> (i32, i32, i32) {
    %c0_i32 = arith.constant 0 : i32
    %c0_i32_0 = arith.constant 0 : i32
    %c0_i32_1 = arith.constant 0 : i32
    %c0_i32_2 = arith.constant 0 : i32
    return %c0_i32, %c0_i32_0, %c0_i32_1 : i32, i32, i32
  }
  func.func @transform_4(%arg0: i32) -> (i32, i32) {
    %c0_i32 = arith.constant 0 : i32
    %c0_i32_0 = arith.constant 0 : i32
    %c0_i32_1 = arith.constant 0 : i32
    return %c0_i32, %c0_i32_0 : i32, i32
  }
  func.func @transform_5(%arg0: i32) -> (i32, i32) {
    %c0_i32 = arith.constant 0 : i32
    %c0_i32_0 = arith.constant 0 : i32
    %c0_i32_1 = arith.constant 0 : i32
    return %c0_i32, %c0_i32_0 : i32, i32
  }
  func.func @transform_6(%arg0: i32) -> (i32, i32) {
    %c0_i32 = arith.constant 0 : i32
    %c0_i32_0 = arith.constant 0 : i32
    %c0_i32_1 = arith.constant 0 : i32
    return %c0_i32, %c0_i32_0 : i32, i32
  }
  func.func @transform_7(%arg0: i32) -> (i32, i32) {
    %c0_i32 = arith.constant 0 : i32
    %c0_i32_0 = arith.constant 0 : i32
    %c0_i32_1 = arith.constant 0 : i32
    return %c0_i32, %c0_i32_0 : i32, i32
  }
  func.func @transform_8(%arg0: i32) -> (i32, i32) {
    %c0_i32 = arith.constant 0 : i32
    %c0_i32_0 = arith.constant 0 : i32
    %c0_i32_1 = arith.constant 0 : i32
    return %c0_i32, %c0_i32_0 : i32, i32
  }
  func.func @transform_9(%arg0: i32) -> (i32, i32) {
    %c0_i32 = arith.constant 0 : i32
    %c0_i32_0 = arith.constant 0 : i32
    return %c0_i32, %arg0 : i32, i32
  }
}

</mosaic_0001>

<llo_original>
// kernel: tile.8
$region0: #{tile.8}
  #allocation0 [shape = 's32[1]{0}', space=sflag, size = 0x4, scoped, tag = 'scoped memory for tile.8']
  %s0 = inlined_call_operand.vmem [shape: f32[10], index: 0, kind: input, shape index: {}]
  %s1 = inlined_call_operand.vmem [shape: f32[16,10], index: 1, kind: output, shape index: {}]
  // Predicated region
  $region2: #{tile.8} parent=0 // pred_check
    _
  $region3: #{tile.8} parent=0 // pred_check_branch
    %3 = sbr.rel (0) target = $region5
  $region4: #{tile.8} parent=0 // pred_region
    _
  $region5: #{tile.8} parent=0 // pred_fallthru
    _
  %v4 = vld [vmem:[%s0] ss:$0 sm:$0xff]
  %5 = vst [vmem:[%s1] sm:$0xff] %v4
  %s6 = scalar_lea.vmem %s1, 8
  %7 = vst [vmem:[%s6] sm:$0xff] %v4

// kernel: tile.0
$region0: #{tile.0}
  %s0 = inlined_call_operand.vmem [shape: f32[16,10], index: 0, kind: input, shape index: {}]
  %s1 = inlined_call_operand.vmem [shape: f32[160,1], index: 1, kind: output, shape index: {}]
  %v2 = vld [vmem:[%s0] sm:$0xff]
  %vm3 = vcmask 7168
  %4 = vst.msk [vmem:[%s1] ss:$10 sm:$0xff] %vm3, %v2
  %s5 = scalar_lea.vmem %s0, 8
  %v6 = vld [vmem:[%s5] sm:$0xff]
  %vm7 = vcmask 7168
  %s8 = scalar_lea.vmem %s1, 80
  %9 = vst.msk [vmem:[%s8] ss:$10 sm:$0xff] %vm7, %v6
  %v10 = vld.sshfl [vmem:[%s0] sm:$0xff pattern:$0xbe147ad0]
  %11 = vrot.lane.b32.xlu0 %v10, 127
  %v12 = vpop.permute.xlu0 %11
  %vm13 = vcmask 7168
  %s14 = scalar_lea.vmem %s1, 1
  %15 = vst.msk [vmem:[%s14] ss:$130 sm:$0x3] %vm13, %v12
  %s16 = scalar_lea.vmem %s1, 161
  %17 = vst.msk [vmem:[%s16] ss:$-30 sm:$0x3c] %vm13, %v12
  %s18 = scalar_lea.vmem %s1, 321
  %19 = vst.msk [vmem:[%s18] ss:$-30 sm:$0xc0] %vm13, %v12
  %s20 = scalar_lea.vmem %s0, 2
  %v21 = vld.sshfl [vmem:[%s20] sm:$0xff pattern:$0x147ad036]
  %22 = vrot.lane.b32.xlu0 %v21, 127
  %v23 = vpop.permute.xlu0 %22
  %vm24 = vcmask 7168
  %s25 = scalar_lea.vmem %s1, 81
  %26 = vst.msk [vmem:[%s25] ss:$-30 sm:$0x7] %vm24, %v23
  %s27 = scalar_lea.vmem %s1, 241
  %28 = vst.msk [vmem:[%s27] ss:$-30 sm:$0xf8] %vm24, %v23
  %v29 = vld.sshfl [vmem:[%s0] sm:$0xff pattern:$0xe147ad03]
  %30 = vrot.lane.b32.xlu0 %v29, 126
  %v31 = vpop.permute.xlu0 %30
  %vm32 = vcmask 7168
  %s33 = scalar_lea.vmem %s1, 32
  %34 = vst.msk [vmem:[%s33] ss:$-30 sm:$0x3] %vm32, %v31
  %s35 = scalar_lea.vmem %s1, 192
  %36 = vst.msk [vmem:[%s35] ss:$-30 sm:$0x7c] %vm32, %v31
  %s37 = scalar_lea.vmem %s1, 135
  %38 = vst.msk [vmem:[%s37] sm:$0x80] %vm32, %v31
  %s39 = scalar_lea.vmem %s0, 2
  %v40 = vld.sshfl [vmem:[%s39] sm:$0xff pattern:$0x47ad0369]
  %41 = vrot.lane.b32.xlu0 %v40, 126
  %v42 = vpop.permute.xlu0 %41
  %vm43 = vcmask 7168
  %s44 = scalar_lea.vmem %s1, 112
  %45 = vst.msk [vmem:[%s44] ss:$-30 sm:$0xf] %vm43, %v42
  %s46 = scalar_lea.vmem %s1, 272
  %47 = vst.msk [vmem:[%s46] ss:$-30 sm:$0xf0] %vm43, %v42
  %v48 = vld.sshfl [vmem:[%s0] sm:$0xff pattern:$0xe147ad03]
  %49 = vrot.lane.b32.xlu0 %v48, 125
  %v50 = vpop.permute.xlu0 %49
  %vm51 = vcmask 7168
  %s52 = scalar_lea.vmem %s1, 33
  %53 = vst.msk [vmem:[%s52] ss:$-30 sm:$0x3] %vm51, %v50
  %s54 = scalar_lea.vmem %s1, 193
  %55 = vst.msk [vmem:[%s54] ss:$-30 sm:$0x7c] %vm51, %v50
  %s56 = scalar_lea.vmem %s1, 136
  %57 = vst.msk [vmem:[%s56] sm:$0x80] %vm51, %v50
  %s58 = scalar_lea.vmem %s0, 2
  %v59 = vld.sshfl [vmem:[%s58] sm:$0xff pattern:$0x47ad0369]
  %60 = vrot.lane.b32.xlu0 %v59, 125
  %v61 = vpop.permute.xlu0 %60
  %vm62 = vcmask 7168
  %s63 = scalar_lea.vmem %s1, 113
  %64 = vst.msk [vmem:[%s63] ss:$-30 sm:$0xf] %vm62, %v61
  %s65 = scalar_lea.vmem %s1, 273
  %66 = vst.msk [vmem:[%s65] ss:$-30 sm:$0xf0] %vm62, %v61
  %v67 = vld.sshfl [vmem:[%s0] sm:$0xff pattern:$0x147ad036]
  %68 = vrot.lane.b32.xlu0 %v67, 124
  %v69 = vpop.permute.xlu0 %68
  %vm70 = vcmask 7168
  %s71 = scalar_lea.vmem %s1, 64
  %72 = vst.msk [vmem:[%s71] ss:$-30 sm:$0x7] %vm70, %v69
  %s73 = scalar_lea.vmem %s1, 224
  %74 = vst.msk [vmem:[%s73] ss:$-30 sm:$0xf8] %vm70, %v69
  %s75 = scalar_lea.vmem %s0, 2
  %v76 = vld.sshfl [vmem:[%s75] sm:$0xff pattern:$0x7ad0369c]
  %77 = vrot.lane.b32.xlu0 %v76, 124
  %v78 = vpop.permute.xlu0 %77
  %vm79 = vcmask 7168
  %s80 = scalar_lea.vmem %s1, 144
  %81 = vst.msk [vmem:[%s80] ss:$-30 sm:$0x1f] %vm79, %v78
  %s82 = scalar_lea.vmem %s1, 304
  %83 = vst.msk [vmem:[%s82] ss:$-30 sm:$0xe0] %vm79, %v78
  %v84 = vld.sshfl [vmem:[%s0] sm:$0xff pattern:$0x147ad036]
  %85 = vrot.lane.b32.xlu0 %v84, 123
  %v86 = vpop.permute.xlu0 %85
  %vm87 = vcmask 7168
  %s88 = scalar_lea.vmem %s1, 65
  %89 = vst.msk [vmem:[%s88] ss:$-30 sm:$0x7] %vm87, %v86
  %s90 = scalar_lea.vmem %s1, 225
  %91 = vst.msk [vmem:[%s90] ss:$-30 sm:$0xf8] %vm87, %v86
  %s92 = scalar_lea.vmem %s0, 2
  %v93 = vld.sshfl [vmem:[%s92] sm:$0xff pattern:$0x7ad0369c]
  %94 = vrot.lane.b32.xlu0 %v93, 123
  %v95 = vpop.permute.xlu0 %94
  %vm96 = vcmask 7168
  %s97 = scalar_lea.vmem %s1, 145
  %98 = vst.msk [vmem:[%s97] ss:$-30 sm:$0x1f] %vm96, %v95
  %s99 = scalar_lea.vmem %s1, 305
  %100 = vst.msk [vmem:[%s99] ss:$-30 sm:$0xe0] %vm96, %v95
  %v101 = vld.sshfl [vmem:[%s0] sm:$0xff pattern:$0x47ad0369]
  %102 = vrot.lane.b32.xlu0 %v101, 122
  %v103 = vpop.permute.xlu0 %102
  %vm104 = vcmask 7168
  %s105 = scalar_lea.vmem %s1, 96
  %106 = vst.msk [vmem:[%s105] ss:$-30 sm:$0xf] %vm104, %v103
  %s107 = scalar_lea.vmem %s1, 256
  %108 = vst.msk [vmem:[%s107] ss:$-30 sm:$0xf0] %vm104, %v103
  %s109 = scalar_lea.vmem %s0, 1
  %v110 = vld.sshfl [vmem:[%s109] sm:$0xff pattern:$0xbe147ad0]
  %111 = vrot.lane.b32.xlu0 %v110, 122
  %v112 = vpop.permute.xlu0 %111
  %vm113 = vcmask 7168
  %s114 = scalar_lea.vmem %s1, 16
  %115 = vst.msk [vmem:[%s114] ss:$130 sm:$0x3] %vm113, %v112
  %s116 = scalar_lea.vmem %s1, 176
  %117 = vst.msk [vmem:[%s116] ss:$-30 sm:$0x3c] %vm113, %v112
  %s118 = scalar_lea.vmem %s1, 336
  %119 = vst.msk [vmem:[%s118] ss:$-30 sm:$0xc0] %vm113, %v112
  %v120 = vld.sshfl [vmem:[%s0] sm:$0xff pattern:$0x47ad0369]
  %121 = vrot.lane.b32.xlu0 %v120, 121
  %v122 = vpop.permute.xlu0 %121
  %vm123 = vcmask 7168
  %s124 = scalar_lea.vmem %s1, 97
  %125 = vst.msk [vmem:[%s124] ss:$-30 sm:$0xf] %vm123, %v122
  %s126 = scalar_lea.vmem %s1, 257
  %127 = vst.msk [vmem:[%s126] ss:$-30 sm:$0xf0] %vm123, %v122
  %s128 = scalar_lea.vmem %s0, 1
  %v129 = vld.sshfl [vmem:[%s128] sm:$0xff pattern:$0xbe147ad0]
  %130 = vrot.lane.b32.xlu0 %v129, 121
  %v131 = vpop.permute.xlu0 %130
  %vm132 = vcmask 7168
  %s133 = scalar_lea.vmem %s1, 17
  %134 = vst.msk [vmem:[%s133] ss:$130 sm:$0x3] %vm132, %v131
  %s135 = scalar_lea.vmem %s1, 177
  %136 = vst.msk [vmem:[%s135] ss:$-30 sm:$0x3c] %vm132, %v131
  %s137 = scalar_lea.vmem %s1, 337
  %138 = vst.msk [vmem:[%s137] ss:$-30 sm:$0xc0] %vm132, %v131
  %v139 = vld.sshfl [vmem:[%s0] sm:$0xff pattern:$0x7ad0369c]
  %140 = vrot.lane.b32.xlu0 %v139, 120
  %v141 = vpop.permute.xlu0 %140
  %vm142 = vcmask 7168
  %s143 = scalar_lea.vmem %s1, 128
  %144 = vst.msk [vmem:[%s143] ss:$-30 sm:$0x1f] %vm142, %v141
  %s145 = scalar_lea.vmem %s1, 288
  %146 = vst.msk [vmem:[%s145] ss:$-30 sm:$0xe0] %vm142, %v141
  %s147 = scalar_lea.vmem %s0, 1
  %v148 = vld.sshfl [vmem:[%s147] sm:$0xff pattern:$0xe147ad03]
  %149 = vrot.lane.b32.xlu0 %v148, 120
  %v150 = vpop.permute.xlu0 %149
  %vm151 = vcmask 7168
  %s152 = scalar_lea.vmem %s1, 48
  %153 = vst.msk [vmem:[%s152] ss:$-30 sm:$0x3] %vm151, %v150
  %s154 = scalar_lea.vmem %s1, 208
  %155 = vst.msk [vmem:[%s154] ss:$-30 sm:$0x7c] %vm151, %v150
  %s156 = scalar_lea.vmem %s1, 151
  %157 = vst.msk [vmem:[%s156] sm:$0x80] %vm151, %v150
  %v158 = vld.sshfl [vmem:[%s0] sm:$0xff pattern:$0x7ad0369c]
  %159 = vrot.lane.b32.xlu0 %v158, 119
  %v160 = vpop.permute.xlu0 %159
  %vm161 = vcmask 7168
  %s162 = scalar_lea.vmem %s1, 129
  %163 = vst.msk [vmem:[%s162] ss:$-30 sm:$0x1f] %vm161, %v160
  %s164 = scalar_lea.vmem %s1, 289
  %165 = vst.msk [vmem:[%s164] ss:$-30 sm:$0xe0] %vm161, %v160
  %s166 = scalar_lea.vmem %s0, 1
  %v167 = vld.sshfl [vmem:[%s166] sm:$0xff pattern:$0xe147ad03]
  %168 = vrot.lane.b32.xlu0 %v167, 119
  %v169 = vpop.permute.xlu0 %168
  %vm170 = vcmask 7168
  %s171 = scalar_lea.vmem %s1, 49
  %172 = vst.msk [vmem:[%s171] ss:$-30 sm:$0x3] %vm170, %v169
  %s173 = scalar_lea.vmem %s1, 209
  %174 = vst.msk [vmem:[%s173] ss:$-30 sm:$0x7c] %vm170, %v169
  %s175 = scalar_lea.vmem %s1, 152
  %176 = vst.msk [vmem:[%s175] sm:$0x80] %vm170, %v169

// kernel: cnn_forward.1
$region0: #{cnn_forward.1}
  #allocation0 [shape = 'u32[]', space=smem, size = 0x4, offset = 0x4, fixed_abs, tag = 'smem constant byte address 0x4 - core index']
  #allocation1 [shape = 'u32[144,128]{1,0:T(1,128)}', space=vmem, size = 0x12000, scoped, tag = 'internal scratch']
  %s0 = inlined_call_operand.vmem [shape: f32[100,256], index: 0, kind: input, shape index: {}]
  %s1 = inlined_call_operand.vmem [shape: f32[160,100], index: 1, kind: input, shape index: {}]
  %s2 = inlined_call_operand.vmem [shape: f32[160,1], index: 2, kind: input, shape index: {}]
  %s3 = inlined_call_operand.vmem [shape: f32[3,80,30], index: 3, kind: input, shape index: {}]
  %s4 = inlined_call_operand.vmem [shape: f32[80,1], index: 4, kind: input, shape index: {}]
  %s5 = inlined_call_operand.vmem [shape: f32[60,80], index: 5, kind: input, shape index: {}]
  %s6 = inlined_call_operand.vmem [shape: f32[60,1], index: 6, kind: input, shape index: {}]
  %s7 = inlined_call_operand.vmem [shape: f32[40,60], index: 7, kind: input, shape index: {}]
  %s8 = inlined_call_operand.vmem [shape: f32[40,1], index: 8, kind: input, shape index: {}]
  %s9 = inlined_call_operand.hbm [shape: f32[40,256], index: 9, kind: output, shape index: {}]
  %s10 = sld [smem:[#allocation0]]
  $region107: #{cnn_forward.1} parent=0
    _
  %s12 = ssub.s32 1, %s10
  %s13 = scalar_select 0, %s12, %s10
  $region1: #{cnn_forward.1} parent=0
    #allocation2 [shape = 'u8[106496]{0}', space=vmem, size = 0x1a000, scoped, tag = 'input window, operand 0']
    #allocation3 [shape = 'u8[40960]{0}', space=vmem, size = 0xa000, scoped, tag = 'output window, operand 0']
    #allocation4 [shape = 's32[2]{0}', space=sflag, size = 0x8, scoped, tag = 'scoped memory for cnn_forward.1']
    %14 = vsyncpa [#allocation4], 0
    %s15 = scalar_lea.sflag [#allocation4], 1
    %16 = vsyncpa %s15, 0
    loop: start=0, step=1, limit=4
    $region2: #{cnn_forward.1} parent=1 // loop_pre_header
      _
    $region3: #{cnn_forward.1} parent=1 // loop_header
      %s18 = sphi 0, %s22
      %p19 = scmp.ge.s32.totalorder %s18, 4
      %s28 = sphi 0, %s30
      %s31 = sphi 0, %s28
      %s32 = sphi 0, %s31
      %s48 = sphi 0, %s32
      %s52 = sphi 0, %s52
      %s54 = sphi 0, %s52
      %s55 = sphi 0, %s54
      %s69 = sphi 0, %s55
      %s73 = sphi 0, %s73
      %s75 = sphi 0, %s73
      %s76 = sphi 0, %s75
      %s90 = sphi 0, %s76
      %s94 = sphi 0, %s94
      %s96 = sphi 0, %s94
      %s97 = sphi 0, %s96
      %s111 = sphi 0, %s97
      %s115 = sphi 0, %s115
      %s117 = sphi 0, %s115
      %s118 = sphi 0, %s117
      %s132 = sphi 0, %s118
      %s136 = sphi 0, %s136
      %s138 = sphi 0, %s136
      %s139 = sphi 0, %s138
      %s153 = sphi 0, %s139
      %s157 = sphi 0, %s157
      %s159 = sphi 0, %s157
      %s160 = sphi 0, %s159
      %s174 = sphi 0, %s160
      %s178 = sphi 0, %s178
      %s180 = sphi 0, %s178
      %s181 = sphi 0, %s180
      %s195 = sphi 0, %s181
      %s199 = sphi 0, %s199
      %s201 = sphi 0, %s199
      %s202 = sphi 0, %s201
      %s216 = sphi 0, %s202
      %s222 = sphi 0, %s224
      %s225 = sphi 0, %s222
      %s226 = sphi 0, %s225
      %s242 = sphi 0, %s226
    $region4: #{cnn_forward.1} parent=1 // loop_header_branch
      %21 = sbr.rel (%p19) target = $region8
    $region5: #{cnn_forward.1} parent=1 // loop_body
      %s23 = ssub.s32 %s18, 1
      %s24 = ssub.s32 %s18, 2
      %s25 = sadd.s32 %s18, 1
      %s26 = ssub.s32 %s18, %s25
      %p27 = scmp.eq.s32.totalorder %s26, 0
      %s29 = sadd.s32 %s28, 1
      %s30 = scalar_select %p27, %s28, %s29
      %p33 = pneg %p27
      %p34 = scmp.eq.s32.totalorder %s18, 1
      %p35 = por %p33, %p34
      %p36 = scmp.ne.s32.totalorder %s28, %s31
      %p37 = scmp.eq.s32.totalorder %s18, 0
      %p38 = por %p36, %p37
      %p39 = scmp.ne.s32.totalorder %s28, %s31
      %p40 = scmp.eq.s32.totalorder %s23, 1
      %p41 = por %p39, %p40
      %p42 = scmp.ne.s32.totalorder %s31, %s32
      %p43 = scmp.eq.s32.totalorder %s23, 0
      %p44 = por %p42, %p43
      %p45 = scmp.ne.s32.totalorder %s31, %s32
      %p46 = scmp.eq.s32.totalorder %s24, 1
      %p47 = por %p45, %p46
      %p49 = scmp.ne.s32.totalorder %s32, %s48
      %p50 = scmp.eq.s32.totalorder %s24, 0
      %p51 = por %p49, %p50
      %s53 = sadd.s32 %s52, 1
      %p56 = scmp.eq.s32.totalorder %s18, 1
      %p57 = scmp.ne.s32.totalorder %s52, %s54
      %p58 = scmp.eq.s32.totalorder %s18, 0
      %p59 = por %p57, %p58
      %p60 = scmp.ne.s32.totalorder %s52, %s54
      %p61 = scmp.eq.s32.totalorder %s23, 1
      %p62 = por %p60, %p61
      %p63 = scmp.ne.s32.totalorder %s54, %s55
      %p64 = scmp.eq.s32.totalorder %s23, 0
      %p65 = por %p63, %p64
      %p66 = scmp.ne.s32.totalorder %s54, %s55
      %p67 = scmp.eq.s32.totalorder %s24, 1
      %p68 = por %p66, %p67
      %p70 = scmp.ne.s32.totalorder %s55, %s69
      %p71 = scmp.eq.s32.totalorder %s24, 0
      %p72 = por %p70, %p71
      %s74 = sadd.s32 %s73, 1
      %p77 = scmp.eq.s32.totalorder %s18, 1
      %p78 = scmp.ne.s32.totalorder %s73, %s75
      %p79 = scmp.eq.s32.totalorder %s18, 0
      %p80 = por %p78, %p79
      %p81 = scmp.ne.s32.totalorder %s73, %s75
      %p82 = scmp.eq.s32.totalorder %s23, 1
      %p83 = por %p81, %p82
      %p84 = scmp.ne.s32.totalorder %s75, %s76
      %p85 = scmp.eq.s32.totalorder %s23, 0
      %p86 = por %p84, %p85
      %p87 = scmp.ne.s32.totalorder %s75, %s76
      %p88 = scmp.eq.s32.totalorder %s24, 1
      %p89 = por %p87, %p88
      %p91 = scmp.ne.s32.totalorder %s76, %s90
      %p92 = scmp.eq.s32.totalorder %s24, 0
      %p93 = por %p91, %p92
      %s95 = sadd.s32 %s94, 1
      %p98 = scmp.eq.s32.totalorder %s18, 1
      %p99 = scmp.ne.s32.totalorder %s94, %s96
      %p100 = scmp.eq.s32.totalorder %s18, 0
      %p101 = por %p99, %p100
      %p102 = scmp.ne.s32.totalorder %s94, %s96
      %p103 = scmp.eq.s32.totalorder %s23, 1
      %p104 = por %p102, %p103
      %p105 = scmp.ne.s32.totalorder %s96, %s97
      %p106 = scmp.eq.s32.totalorder %s23, 0
      %p107 = por %p105, %p106
      %p108 = scmp.ne.s32.totalorder %s96, %s97
      %p109 = scmp.eq.s32.totalorder %s24, 1
      %p110 = por %p108, %p109
      %p112 = scmp.ne.s32.totalorder %s97, %s111
      %p113 = scmp.eq.s32.totalorder %s24, 0
      %p114 = por %p112, %p113
      %s116 = sadd.s32 %s115, 1
      %p119 = scmp.eq.s32.totalorder %s18, 1
      %p120 = scmp.ne.s32.totalorder %s115, %s117
      %p121 = scmp.eq.s32.totalorder %s18, 0
      %p122 = por %p120, %p121
      %p123 = scmp.ne.s32.totalorder %s115, %s117
      %p124 = scmp.eq.s32.totalorder %s23, 1
      %p125 = por %p123, %p124
      %p126 = scmp.ne.s32.totalorder %s117, %s118
      %p127 = scmp.eq.s32.totalorder %s23, 0
      %p128 = por %p126, %p127
      %p129 = scmp.ne.s32.totalorder %s117, %s118
      %p130 = scmp.eq.s32.totalorder %s24, 1
      %p131 = por %p129, %p130
      %p133 = scmp.ne.s32.totalorder %s118, %s132
      %p134 = scmp.eq.s32.totalorder %s24, 0
      %p135 = por %p133, %p134
      %s137 = sadd.s32 %s136, 1
      %p140 = scmp.eq.s32.totalorder %s18, 1
      %p141 = scmp.ne.s32.totalorder %s136, %s138
      %p142 = scmp.eq.s32.totalorder %s18, 0
      %p143 = por %p141, %p142
      %p144 = scmp.ne.s32.totalorder %s136, %s138
      %p145 = scmp.eq.s32.totalorder %s23, 1
      %p146 = por %p144, %p145
      %p147 = scmp.ne.s32.totalorder %s138, %s139
      %p148 = scmp.eq.s32.totalorder %s23, 0
      %p149 = por %p147, %p148
      %p150 = scmp.ne.s32.totalorder %s138, %s139
      %p151 = scmp.eq.s32.totalorder %s24, 1
      %p152 = por %p150, %p151
      %p154 = scmp.ne.s32.totalorder %s139, %s153
      %p155 = scmp.eq.s32.totalorder %s24, 0
      %p156 = por %p154, %p155
      %s158 = sadd.s32 %s157, 1
      %p161 = scmp.eq.s32.totalorder %s18, 1
      %p162 = scmp.ne.s32.totalorder %s157, %s159
      %p163 = scmp.eq.s32.totalorder %s18, 0
      %p164 = por %p162, %p163
      %p165 = scmp.ne.s32.totalorder %s157, %s159
      %p166 = scmp.eq.s32.totalorder %s23, 1
      %p167 = por %p165, %p166
      %p168 = scmp.ne.s32.totalorder %s159, %s160
      %p169 = scmp.eq.s32.totalorder %s23, 0
      %p170 = por %p168, %p169
      %p171 = scmp.ne.s32.totalorder %s159, %s160
      %p172 = scmp.eq.s32.totalorder %s24, 1
      %p173 = por %p171, %p172
      %p175 = scmp.ne.s32.totalorder %s160, %s174
      %p176 = scmp.eq.s32.totalorder %s24, 0
      %p177 = por %p175, %p176
      %s179 = sadd.s32 %s178, 1
      %p182 = scmp.eq.s32.totalorder %s18, 1
      %p183 = scmp.ne.s32.totalorder %s178, %s180
      %p184 = scmp.eq.s32.totalorder %s18, 0
      %p185 = por %p183, %p184
      %p186 = scmp.ne.s32.totalorder %s178, %s180
      %p187 = scmp.eq.s32.totalorder %s23, 1
      %p188 = por %p186, %p187
      %p189 = scmp.ne.s32.totalorder %s180, %s181
      %p190 = scmp.eq.s32.totalorder %s23, 0
      %p191 = por %p189, %p190
      %p192 = scmp.ne.s32.totalorder %s180, %s181
      %p193 = scmp.eq.s32.totalorder %s24, 1
      %p194 = por %p192, %p193
      %p196 = scmp.ne.s32.totalorder %s181, %s195
      %p197 = scmp.eq.s32.totalorder %s24, 0
      %p198 = por %p196, %p197
      %s200 = sadd.s32 %s199, 1
      %p203 = scmp.eq.s32.totalorder %s18, 1
      %p204 = scmp.ne.s32.totalorder %s199, %s201
      %p205 = scmp.eq.s32.totalorder %s18, 0
      %p206 = por %p204, %p205
      %p207 = scmp.ne.s32.totalorder %s199, %s201
      %p208 = scmp.eq.s32.totalorder %s23, 1
      %p209 = por %p207, %p208
      %p210 = scmp.ne.s32.totalorder %s201, %s202
      %p211 = scmp.eq.s32.totalorder %s23, 0
      %p212 = por %p210, %p211
      %p213 = scmp.ne.s32.totalorder %s201, %s202
      %p214 = scmp.eq.s32.totalorder %s24, 1
      %p215 = por %p213, %p214
      %p217 = scmp.ne.s32.totalorder %s202, %s216
      %p218 = scmp.eq.s32.totalorder %s24, 0
      %p219 = por %p217, %p218
      %s220 = ssub.s32 %s18, %s25
      %p221 = scmp.eq.s32.totalorder %s220, 0
      %s223 = sadd.s32 %s222, 1
      %s224 = scalar_select %p221, %s222, %s223
      %p227 = pneg %p221
      %p228 = scmp.eq.s32.totalorder %s18, 1
      %p229 = por %p227, %p228
      %p230 = scmp.ne.s32.totalorder %s222, %s225
      %p231 = scmp.eq.s32.totalorder %s18, 0
      %p232 = por %p230, %p231
      %p233 = scmp.ne.s32.totalorder %s222, %s225
      %p234 = scmp.eq.s32.totalorder %s23, 1
      %p235 = por %p233, %p234
      %p236 = scmp.ne.s32.totalorder %s225, %s226
      %p237 = scmp.eq.s32.totalorder %s23, 0
      %p238 = por %p236, %p237
      %p239 = scmp.ne.s32.totalorder %s225, %s226
      %p240 = scmp.eq.s32.totalorder %s24, 1
      %p241 = por %p239, %p240
      %p243 = scmp.ne.s32.totalorder %s226, %s242
      %p244 = scmp.eq.s32.totalorder %s24, 0
      %p245 = por %p243, %p244
      %p246 = scmp.le.s32.totalorder 1, %s18
      %p247 = scmp.lt.s32.totalorder %s18, 3
      %p248 = pnand %p246, %p247
      %p249 = pneg %p248
      // Predicated region
      $region9: #{cnn_forward.1} parent=5 // pred_check
        _
      $region10: #{cnn_forward.1} parent=5 // pred_check_branch
        %251 = sbr.rel (%p248) target = $region12
      $region11: #{cnn_forward.1} parent=5 // pred_region
        %s252 = ssub.s32 %s18, 1
        // Predicated region
        $region13: #{cnn_forward.1} parent=11 // pred_check
          %p253 = pneg %p65
        $region14: #{cnn_forward.1} parent=11 // pred_check_branch
          %255 = sbr.rel (%p253) target = $region16
        $region15: #{cnn_forward.1} parent=11 // pred_region
          _
        $region16: #{cnn_forward.1} parent=11 // pred_fallthru
          _
        // Predicated region
        $region17: #{cnn_forward.1} parent=11 // pred_check
          %p256 = pneg %p86
        $region18: #{cnn_forward.1} parent=11 // pred_check_branch
          %258 = sbr.rel (%p256) target = $region20
        $region19: #{cnn_forward.1} parent=11 // pred_region
          _
        $region20: #{cnn_forward.1} parent=11 // pred_fallthru
          _
        // Predicated region
        $region21: #{cnn_forward.1} parent=11 // pred_check
          %p259 = pneg %p107
        $region22: #{cnn_forward.1} parent=11 // pred_check_branch
          %261 = sbr.rel (%p259) target = $region24
        $region23: #{cnn_forward.1} parent=11 // pred_region
          _
        $region24: #{cnn_forward.1} parent=11 // pred_fallthru
          _
        // Predicated region
        $region25: #{cnn_forward.1} parent=11 // pred_check
          %p262 = pneg %p128
        $region26: #{cnn_forward.1} parent=11 // pred_check_branch
          %264 = sbr.rel (%p262) target = $region28
        $region27: #{cnn_forward.1} parent=11 // pred_region
          _
        $region28: #{cnn_forward.1} parent=11 // pred_fallthru
          _
        // Predicated region
        $region29: #{cnn_forward.1} parent=11 // pred_check
          %p265 = pneg %p149
        $region30: #{cnn_forward.1} parent=11 // pred_check_branch
          %267 = sbr.rel (%p265) target = $region32
        $region31: #{cnn_forward.1} parent=11 // pred_region
          _
        $region32: #{cnn_forward.1} parent=11 // pred_fallthru
          _
        // Predicated region
        $region33: #{cnn_forward.1} parent=11 // pred_check
          %p268 = pneg %p170
        $region34: #{cnn_forward.1} parent=11 // pred_check_branch
          %270 = sbr.rel (%p268) target = $region36
        $region35: #{cnn_forward.1} parent=11 // pred_region
          _
        $region36: #{cnn_forward.1} parent=11 // pred_fallthru
          _
        // Predicated region
        $region37: #{cnn_forward.1} parent=11 // pred_check
          %p271 = pneg %p191
        $region38: #{cnn_forward.1} parent=11 // pred_check_branch
          %273 = sbr.rel (%p271) target = $region40
        $region39: #{cnn_forward.1} parent=11 // pred_region
          _
        $region40: #{cnn_forward.1} parent=11 // pred_fallthru
          _
        // Predicated region
        $region41: #{cnn_forward.1} parent=11 // pred_check
          %p274 = pneg %p212
        $region42: #{cnn_forward.1} parent=11 // pred_check_branch
          %276 = sbr.rel (%p274) target = $region44
        $region43: #{cnn_forward.1} parent=11 // pred_region
          _
        $region44: #{cnn_forward.1} parent=11 // pred_fallthru
          _
      $region12: #{cnn_forward.1} parent=5 // pred_fallthru
        _
      %p277 = scmp.lt.s32.totalorder %s18, 2
      // Predicated region
      $region45: #{cnn_forward.1} parent=5 // pred_check
        %p278 = pneg %p277
      $region46: #{cnn_forward.1} parent=5 // pred_check_branch
        %280 = sbr.rel (%p278) target = $region48
      $region47: #{cnn_forward.1} parent=5 // pred_region
        // Predicated region
        $region49: #{cnn_forward.1} parent=47 // pred_check
          %p281 = pneg %p38
        $region50: #{cnn_forward.1} parent=47 // pred_check_branch
          %283 = sbr.rel (%p281) target = $region52
        $region51: #{cnn_forward.1} parent=47 // pred_region
          %s284 = sand.u32 %s28, 1
          %s285 = sand.u32 %s28, 1
          %s286 = smul.addr %s285, 104
          %s287 = scalar_lea.vmem [#allocation2], %s286
          %s288 = smul.addr %s18, 8
          %s289 = scalar_lea.vmem %s0, %s288
          // Predicated region
          $region53: #{cnn_forward.1} parent=51 // pred_check
            _
          $region54: #{cnn_forward.1} parent=51 // pred_check_branch
            %291 = sbr.rel (0) target = $region56
          $region55: #{cnn_forward.1} parent=51 // pred_region
            // Predicated region
            $region57: #{cnn_forward.1} parent=55 // pred_check
              _
            $region58: #{cnn_forward.1} parent=55 // pred_check_branch
              %293 = sbr.rel (0) target = $region60
            $region59: #{cnn_forward.1} parent=55 // pred_region
              // Predicated region
              $region72: #{cnn_forward.1} parent=59 // pred_check
                _
              $region73: #{cnn_forward.1} parent=59 // pred_check_branch
                %332 = sbr.rel (0) target = $region75
              $region74: #{cnn_forward.1} parent=59 // pred_region
                loop: start=0, step=1, limit=1
                $region76: #{cnn_forward.1} parent=74 // loop_pre_header
                  _
                $region77: #{cnn_forward.1} parent=74 // loop_header
                  %s334 = sphi 0, %s338
                  %p335 = scmp.ge.s32.totalorder %s334, 1
                  %s339 = sphi %s289, %s289
                  %s340 = sphi %s287, %s287
                $region78: #{cnn_forward.1} parent=74 // loop_header_branch
                  %337 = sbr.rel (%p335) target = $region82
                $region79: #{cnn_forward.1} parent=74 // loop_body
                  %v341 = vld [vmem:[%s339] sm:$0xff]
                  %342 = vst [vmem:[%s340] sm:$0xff] %v341
                  %v343 = vld [vmem:[%s339 + $0x10] sm:$0xff]
                  %344 = vst [vmem:[%s340 + $0x8] sm:$0xff] %v343
                  %v345 = vld [vmem:[%s339 + $0x20] sm:$0xff]
                  %346 = vst [vmem:[%s340 + $0x10] sm:$0xff] %v345
                  %v347 = vld [vmem:[%s339 + $0x30] sm:$0xff]
                  %348 = vst [vmem:[%s340 + $0x18] sm:$0xff] %v347
                  %v349 = vld [vmem:[%s339 + $0x40] sm:$0xff]
                  %350 = vst [vmem:[%s340 + $0x20] sm:$0xff] %v349
                  %v351 = vld [vmem:[%s339 + $0x50] sm:$0xff]
                  %352 = vst [vmem:[%s340 + $0x28] sm:$0xff] %v351
                  %v353 = vld [vmem:[%s339 + $0x60] sm:$0xff]
                  %354 = vst [vmem:[%s340 + $0x30] sm:$0xff] %v353
                  %v355 = vld [vmem:[%s339 + $0x70] sm:$0xff]
                  %356 = vst [vmem:[%s340 + $0x38] sm:$0xff] %v355
                  %v357 = vld [vmem:[%s339 + $0x80] sm:$0xff]
                  %358 = vst [vmem:[%s340 + $0x40] sm:$0xff] %v357
                  %v359 = vld [vmem:[%s339 + $0x90] sm:$0xff]
                  %360 = vst [vmem:[%s340 + $0x48] sm:$0xff] %v359
                  %v361 = vld [vmem:[%s339 + $0xa0] sm:$0xff]
                  %362 = vst [vmem:[%s340 + $0x50] sm:$0xff] %v361
                  %v363 = vld [vmem:[%s339 + $0xb0] sm:$0xff]
                  %364 = vst [vmem:[%s340 + $0x58] sm:$0xff] %v363
                  %v365 = vld [vmem:[%s339 + $0xc0] sm:$0xff]
                  %366 = vst [vmem:[%s340 + $0x60] sm:$0xff] %v365
                $region80: #{cnn_forward.1} parent=74 // loop_footer
                  %s338 = sadd.s32 1, %s334
                $region81: #{cnn_forward.1} parent=74 // loop_footer_branch
                  %333 = sbr.rel target = $region77
                $region82: #{cnn_forward.1} parent=74 // loop_exit
                  _
              $region75: #{cnn_forward.1} parent=59 // pred_fallthru
                _
              // Predicated region
              $region83: #{cnn_forward.1} parent=59 // pred_check
                _
              $region84: #{cnn_forward.1} parent=59 // pred_check_branch
                %368 = sbr.rel target = $region86
              $region85: #{cnn_forward.1} parent=59 // pred_region
                _
              $region86: #{cnn_forward.1} parent=59 // pred_fallthru
                _
            $region60: #{cnn_forward.1} parent=55 // pred_fallthru
              _
            // Predicated region
            $region61: #{cnn_forward.1} parent=55 // pred_check
              _
            $region62: #{cnn_forward.1} parent=55 // pred_check_branch
              %295 = sbr.rel target = $region64
            $region63: #{cnn_forward.1} parent=55 // pred_region
              loop: start=0, step=1, limit=1
              $region65: #{cnn_forward.1} parent=63 // loop_pre_header
                _
              $region66: #{cnn_forward.1} parent=63 // loop_header
                %s298 = sphi 0, %s302
                %p299 = scmp.ge.s32.totalorder %s298, 1
                %s303 = sphi %s289, %s289
                %s304 = sphi %s287, %s287
              $region67: #{cnn_forward.1} parent=63 // loop_header_branch
                %301 = sbr.rel (%p299) target = $region71
              $region68: #{cnn_forward.1} parent=63 // loop_body
                %v305 = vld [vmem:[%s303] sm:$0xff]
                %306 = vst [vmem:[%s304] sm:$0xff] %v305
                %v307 = vld [vmem:[%s303 + $0x10] sm:$0xff]
                %308 = vst [vmem:[%s304 + $0x8] sm:$0xff] %v307
                %v309 = vld [vmem:[%s303 + $0x20] sm:$0xff]
                %310 = vst [vmem:[%s304 + $0x10] sm:$0xff] %v309
                %v311 = vld [vmem:[%s303 + $0x30] sm:$0xff]
                %312 = vst [vmem:[%s304 + $0x18] sm:$0xff] %v311
                %v313 = vld [vmem:[%s303 + $0x40] sm:$0xff]
                %314 = vst [vmem:[%s304 + $0x20] sm:$0xff] %v313
                %v315 = vld [vmem:[%s303 + $0x50] sm:$0xff]
                %316 = vst [vmem:[%s304 + $0x28] sm:$0xff] %v315
                %v317 = vld [vmem:[%s303 + $0x60] sm:$0xff]
                %318 = vst [vmem:[%s304 + $0x30] sm:$0xff] %v317
                %v319 = vld [vmem:[%s303 + $0x70] sm:$0xff]
                %320 = vst [vmem:[%s304 + $0x38] sm:$0xff] %v319
                %v321 = vld [vmem:[%s303 + $0x80] sm:$0xff]
                %322 = vst [vmem:[%s304 + $0x40] sm:$0xff] %v321
                %v323 = vld [vmem:[%s303 + $0x90] sm:$0xff]
                %324 = vst [vmem:[%s304 + $0x48] sm:$0xff] %v323
                %v325 = vld [vmem:[%s303 + $0xa0] sm:$0xff]
                %326 = vst [vmem:[%s304 + $0x50] sm:$0xff] %v325
                %v327 = vld [vmem:[%s303 + $0xb0] sm:$0xff]
                %328 = vst [vmem:[%s304 + $0x58] sm:$0xff] %v327
                %v329 = vld [vmem:[%s303 + $0xc0] sm:$0xff]
                %330 = vst [vmem:[%s304 + $0x60] sm:$0xff] %v329
              $region69: #{cnn_forward.1} parent=63 // loop_footer
                %s302 = sadd.s32 1, %s298
              $region70: #{cnn_forward.1} parent=63 // loop_footer_branch
                %297 = sbr.rel target = $region66
              $region71: #{cnn_forward.1} parent=63 // loop_exit
                _
            $region64: #{cnn_forward.1} parent=55 // pred_fallthru
              _
          $region56: #{cnn_forward.1} parent=51 // pred_fallthru
            _
          %369 = vnop
        $region52: #{cnn_forward.1} parent=47 // pred_fallthru
          _
      $region48: #{cnn_forward.1} parent=5 // pred_fallthru
        _
      %p370 = scmp.le.s32.totalorder 1, %s18
      %p371 = scmp.lt.s32.totalorder %s18, 3
      %p372 = pnand %p370, %p371
      %p373 = pneg %p372
      // Predicated region
      $region87: #{cnn_forward.1} parent=5 // pred_check
        _
      $region88: #{cnn_forward.1} parent=5 // pred_check_branch
        %375 = sbr.rel (%p372) target = $region90
      $region89: #{cnn_forward.1} parent=5 // pred_region
        %s376 = ssub.s32 %s18, 1
        %s377 = sand.u32 %s31, 1
        %s378 = sand.u32 %s31, 1
        %s379 = smul.addr %s378, 104
        %s380 = scalar_lea.vmem [#allocation2], %s379
        // Predicated region
        $region91: #{cnn_forward.1} parent=89 // pred_check
          %p381 = pneg %p44
        $region92: #{cnn_forward.1} parent=89 // pred_check_branch
          %383 = sbr.rel (%p381) target = $region94
        $region93: #{cnn_forward.1} parent=89 // pred_region
          _
        $region94: #{cnn_forward.1} parent=89 // pred_fallthru
          _
        %s384 = sand.u32 %s31, 1
        %s385 = sand.u32 %s31, 1
        %s386 = smul.addr %s385, 104
        %s387 = scalar_lea.vmem [#allocation2], %s386
        %p388 = pneg %p44
        %p389 = pneg %p41
        %p390 = pneg %p65
        %p391 = pneg %p62
        %p392 = pneg %p86
        %p393 = pneg %p83
        %p394 = pneg %p107
        %p395 = pneg %p104
        %p396 = pneg %p128
        %p397 = pneg %p125
        %p398 = pneg %p149
        %p399 = pneg %p146
        %p400 = pneg %p170
        %p401 = pneg %p167
        %p402 = pneg %p191
        %p403 = pneg %p188
        %p404 = pneg %p212
        %p405 = pneg %p209
        %p406 = pneg %p238
        %p407 = pneg %p235
        %s408 = sand.u32 %s225, 1
        %s409 = scalar_lea.sflag [#allocation4], %s408
        %s410 = sand.u32 %s225, 1
        %s411 = smul.addr %s410, 40
        %s412 = scalar_lea.vmem [#allocation3], %s411
        %v413 = vld [vmem:[%s380] sm:$0xff]
        %v414 = vld [vmem:[%s380 + $0x8] sm:$0xff]
        %v415 = vld [vmem:[%s380 + $0x10] sm:$0xff]
        %v416 = vld [vmem:[%s380 + $0x18] sm:$0xff]
        %v417 = vld [vmem:[%s380 + $0x20] sm:$0xff]
        %v418 = vld [vmem:[%s380 + $0x28] sm:$0xff]
        %v419 = vld [vmem:[%s380 + $0x30] sm:$0xff]
        %v420 = vld [vmem:[%s380 + $0x38] sm:$0xff]
        %v421 = vld [vmem:[%s380 + $0x40] sm:$0xff]
        %v422 = vld [vmem:[%s380 + $0x48] sm:$0xff]
        %v423 = vld [vmem:[%s380 + $0x50] sm:$0xff]
        %v424 = vld [vmem:[%s380 + $0x58] sm:$0xff]
        %v425 = vld [vmem:[%s380 + $0x60] sm:$0xf]
        %v426 = vld [vmem:[%s1] sm:$0xff]
        %v427 = vld [vmem:[%s1 + $0x8] sm:$0xff]
        %v428 = vld [vmem:[%s1 + $0x10] sm:$0xff]
        %v429 = vld [vmem:[%s1 + $0x18] sm:$0xff]
        %v430 = vld [vmem:[%s1 + $0x20] sm:$0xff]
        %v431 = vld [vmem:[%s1 + $0x28] sm:$0xff]
        %v432 = vld [vmem:[%s1 + $0x30] sm:$0xff]
        %v433 = vld [vmem:[%s1 + $0x38] sm:$0xff]
        %v434 = vld [vmem:[%s1 + $0x40] sm:$0xff]
        %v435 = vld [vmem:[%s1 + $0x48] sm:$0xff]
        %v436 = vld [vmem:[%s1 + $0x50] sm:$0xff]
        %v437 = vld [vmem:[%s1 + $0x58] sm:$0xff]
        %v438 = vld [vmem:[%s1 + $0x60] sm:$0xff]
        %v439 = vld [vmem:[%s1 + $0x68] sm:$0xff]
        %v440 = vld [vmem:[%s1 + $0x70] sm:$0xff]
        %v441 = vld [vmem:[%s1 + $0x78] sm:$0xff]
        %v442 = vld [vmem:[%s1 + $0x80] sm:$0xff]
        %v443 = vld [vmem:[%s1 + $0x88] sm:$0xff]
        %v444 = vld [vmem:[%s1 + $0x90] sm:$0xff]
        %v445 = vld [vmem:[%s1 + $0x98] sm:$0xff]
        %v446 = vld [vmem:[%s2] sm:$0xff]
        %v447 = vld [vmem:[%s2 + $0x8] sm:$0xff]
        %v448 = vld [vmem:[%s2 + $0x10] sm:$0xff]
        %v449 = vld [vmem:[%s2 + $0x18] sm:$0xff]
        %v450 = vld [vmem:[%s2 + $0x20] sm:$0xff]
        %v451 = vld [vmem:[%s2 + $0x28] sm:$0xff]
        %v452 = vld [vmem:[%s2 + $0x30] sm:$0xff]
        %v453 = vld [vmem:[%s2 + $0x38] sm:$0xff]
        %v454 = vld [vmem:[%s2 + $0x40] sm:$0xff]
        %v455 = vld [vmem:[%s2 + $0x48] sm:$0xff]
        %v456 = vld [vmem:[%s2 + $0x50] sm:$0xff]
        %v457 = vld [vmem:[%s2 + $0x58] sm:$0xff]
        %v458 = vld [vmem:[%s2 + $0x60] sm:$0xff]
        %v459 = vld [vmem:[%s2 + $0x68] sm:$0xff]
        %v460 = vld [vmem:[%s2 + $0x70] sm:$0xff]
        %v461 = vld [vmem:[%s2 + $0x78] sm:$0xff]
        %v462 = vld [vmem:[%s2 + $0x80] sm:$0xff]
        %v463 = vld [vmem:[%s2 + $0x88] sm:$0xff]
        %v464 = vld [vmem:[%s2 + $0x90] sm:$0xff]
        %v465 = vld [vmem:[%s2 + $0x98] sm:$0xff]
        %467 = vset.pattern.permute.xlu0 0
        %468 = vperm.xlu0 %467, %v446
        %v469 = vpop.permute.xlu0 %468
        %472 = vset.pattern.permute.xlu0 0
        %473 = vperm.xlu0 %472, %v447
        %v474 = vpop.permute.xlu0 %473
        %477 = vset.pattern.permute.xlu0 0
        %478 = vperm.xlu0 %477, %v448
        %v479 = vpop.permute.xlu0 %478
        %482 = vset.pattern.permute.xlu0 0
        %483 = vperm.xlu0 %482, %v449
        %v484 = vpop.permute.xlu0 %483
        %487 = vset.pattern.permute.xlu0 0
        %488 = vperm.xlu0 %487, %v450
        %v489 = vpop.permute.xlu0 %488
        %492 = vset.pattern.permute.xlu0 0
        %493 = vperm.xlu0 %492, %v451
        %v494 = vpop.permute.xlu0 %493
        %497 = vset.pattern.permute.xlu0 0
        %498 = vperm.xlu0 %497, %v452
        %v499 = vpop.permute.xlu0 %498
        %502 = vset.pattern.permute.xlu0 0
        %503 = vperm.xlu0 %502, %v453
        %v504 = vpop.permute.xlu0 %503
        %507 = vset.pattern.permute.xlu0 0
        %508 = vperm.xlu0 %507, %v454
        %v509 = vpop.permute.xlu0 %508
        %512 = vset.pattern.permute.xlu0 0
        %513 = vperm.xlu0 %512, %v455
        %v514 = vpop.permute.xlu0 %513
        %517 = vset.pattern.permute.xlu0 0
        %518 = vperm.xlu0 %517, %v456
        %v519 = vpop.permute.xlu0 %518
        %522 = vset.pattern.permute.xlu0 0
        %523 = vperm.xlu0 %522, %v457
        %v524 = vpop.permute.xlu0 %523
        %527 = vset.pattern.permute.xlu0 0
        %528 = vperm.xlu0 %527, %v458
        %v529 = vpop.permute.xlu0 %528
        %532 = vset.pattern.permute.xlu0 0
        %533 = vperm.xlu0 %532, %v459
        %v534 = vpop.permute.xlu0 %533
        %537 = vset.pattern.permute.xlu0 0
        %538 = vperm.xlu0 %537, %v460
        %v539 = vpop.permute.xlu0 %538
        %542 = vset.pattern.permute.xlu0 0
        %543 = vperm.xlu0 %542, %v461
        %v544 = vpop.permute.xlu0 %543
        %547 = vset.pattern.permute.xlu0 0
        %548 = vperm.xlu0 %547, %v462
        %v549 = vpop.permute.xlu0 %548
        %552 = vset.pattern.permute.xlu0 0
        %553 = vperm.xlu0 %552, %v463
        %v554 = vpop.permute.xlu0 %553
        %557 = vset.pattern.permute.xlu0 0
        %558 = vperm.xlu0 %557, %v464
        %v559 = vpop.permute.xlu0 %558
        %562 = vset.pattern.permute.xlu0 0
        %563 = vperm.xlu0 %562, %v465
        %v564 = vpop.permute.xlu0 %563
        %vm566 = vcmask 818176
        %v568 = vsel %vm566, %v426, 0
        %v571 = vsel %vm566, %v427, 0
        %v574 = vsel %vm566, %v428, 0
        %v577 = vsel %vm566, %v429, 0
        %v580 = vsel %vm566, %v430, 0
        %v583 = vsel %vm566, %v431, 0
        %v586 = vsel %vm566, %v432, 0
        %v589 = vsel %vm566, %v433, 0
        %v592 = vsel %vm566, %v434, 0
        %v595 = vsel %vm566, %v435, 0
        %v598 = vsel %vm566, %v436, 0
        %v601 = vsel %vm566, %v437, 0
        %v604 = vsel %vm566, %v438, 0
        %v607 = vsel %vm566, %v439, 0
        %v610 = vsel %vm566, %v440, 0
        %v613 = vsel %vm566, %v441, 0
        %v616 = vsel %vm566, %v442, 0
        %v619 = vsel %vm566, %v443, 0
        %v622 = vsel %vm566, %v444, 0
        %v625 = vsel %vm566, %v445, 0
        %vm627 = vcmask 1043456
        %v629 = vsel %vm627, %v425, 0
        %631 = vmatprep.subr.mxu0 0.0
        %632 = vmatpush1.msra.mxu0 %v413
        %633 = vmatprep.subr.mxu0 0.0
        %634 = vmatpush1.msra.mxu0 %v414
        %635 = vmatprep.subr.mxu0 0.0
        %636 = vmatpush1.msra.mxu0 %v415
        %637 = vmatprep.subr.mxu0 0.0
        %638 = vmatpush1.msra.mxu0 %v416
        %639 = vmatprep.subr.mxu0 0.0
        %640 = vmatpush1.msra.mxu0 %v417
        %641 = vmatprep.subr.mxu0 0.0
        %642 = vmatpush1.msra.mxu0 %v418
        %643 = vmatprep.subr.mxu0 0.0
        %644 = vmatpush1.msra.mxu0 %v419
        %645 = vmatprep.subr.mxu0 0.0
        %646 = vmatpush1.msra.mxu0 %v420
        %647 = vmatprep.subr.mxu0 0.0
        %648 = vmatpush1.msra.mxu0 %v421
        %649 = vmatprep.subr.mxu0 0.0
        %650 = vmatpush1.msra.mxu0 %v422
        %651 = vmatprep.subr.mxu0 0.0
        %652 = vmatpush1.msra.mxu0 %v423
        %653 = vmatprep.subr.mxu0 0.0
        %654 = vmatpush1.msra.mxu0 %v424
        %655 = vmatprep.subr.mxu0 0.0
        %656 = vmatpush1.msra.mxu0 %v629
        %657 = vmatprep.subr.mxu0 0.0
        %658 = vmatpush1.msra.mxu0 0.0
        %659 = vmatprep.subr.mxu0 0.0
        %660 = vmatpush1.msra.mxu0 0.0
        %661 = vmatprep.subr.mxu0 0.0
        %662 = vmatpush1.msra.mxu0 0.0
        %663 = vmatprep.subr.mxu0 0.0
        %664 = vmatpush1.msra.mxu0 0.0
        %665 = vmatprep.subr.mxu0 0.0
        %666 = vmatpush1.msra.mxu0 0.0
        %667 = vmatprep.subr.mxu0 0.0
        %668 = vmatpush1.msra.mxu0 0.0
        %669 = vmatprep.subr.mxu0 0.0
        %670 = vmatpush1.msra.mxu0 0.0
        %671 = vmatprep.subr.mxu0 0.0
        %672 = vmatpush1.msra.mxu0 0.0
        %673 = vmatprep.subr.mxu0 0.0
        %674 = vmatpush1.msra.mxu0 0.0
        %675 = vmatprep.subr.mxu0 0.0
        %676 = vmatpush1.msra.mxu0 0.0
        %677 = vmatprep.subr.mxu0 0.0
        %678 = vmatpush1.msra.mxu0 0.0
        %679 = vmatprep.subr.mxu0 0.0
        %680 = vmatpush1.msra.mxu0 0.0
        %681 = vmatprep.subr.mxu0 0.0
        %682 = vmatpush1.msra.mxu0 0.0
        %683 = vmatprep.subr.mxu0 0.0
        %684 = vmatpush1.msra.mxu0 0.0
        %685 = vmatprep.subr.mxu0 0.0
        %686 = vmatpush1.msra.mxu0 0.0
        %687 = vmatprep.subr.mxu0 0.0
        %688 = vmatpush1.msra.mxu0 0.0
        %689 = vmatprep.subr.mxu0 0.0
        %690 = vmatpush1.msra.mxu0 0.0
        %691 = vmatprep.subr.mxu0 0.0
        %692 = vmatpush1.msra.mxu0 0.0
        %693 = vmatprep.subr.mxu0 0.0
        %694 = vmatpush1.msra.mxu0 0.0
        %695 = vmatprep.mubr.f32.mxu0 0.0
        %696 = vmatmul.mubr.f32.gmra.mrb[0].mxu0 %v568
        %v697 = vpop.f32.mrb[0].mxu0
        %v698 = vadd.f32 %v469, %v697
        %v699 = vpop.f32.mrb[0].mxu0
        %700 = vmatprep.mubr.f32.mxu0 0.0
        %701 = vmatmul.mubr.f32.gmra.mrb[0].mxu0 %v571
        %v702 = vpop.f32.mrb[0].mxu0
        %v703 = vadd.f32 %v474, %v702
        %v704 = vpop.f32.mrb[0].mxu0
        %705 = vmatprep.mubr.f32.mxu0 0.0
        %706 = vmatmul.mubr.f32.gmra.mrb[0].mxu0 %v574
        %v707 = vpop.f32.mrb[0].mxu0
        %v708 = vadd.f32 %v479, %v707
        %v709 = vpop.f32.mrb[0].mxu0
        %710 = vmatprep.mubr.f32.mxu0 0.0
        %711 = vmatmul.mubr.f32.gmra.mrb[0].mxu0 %v577
        %v712 = vpop.f32.mrb[0].mxu0
        %v713 = vadd.f32 %v484, %v712
        %v714 = vpop.f32.mrb[0].mxu0
        %715 = vmatprep.mubr.f32.mxu0 0.0
        %716 = vmatmul.mubr.f32.gmra.mrb[0].mxu0 %v580
        %v717 = vpop.f32.mrb[0].mxu0
        %v718 = vadd.f32 %v489, %v717
        %v719 = vpop.f32.mrb[0].mxu0
        %720 = vmatprep.mubr.f32.mxu0 0.0
        %721 = vmatmul.mubr.f32.gmra.mrb[0].mxu0 %v583
        %v722 = vpop.f32.mrb[0].mxu0
        %v723 = vadd.f32 %v494, %v722
        %v724 = vpop.f32.mrb[0].mxu0
        %725 = vmatprep.mubr.f32.mxu0 0.0
        %726 = vmatmul.mubr.f32.gmra.mrb[0].mxu0 %v586
        %v727 = vpop.f32.mrb[0].mxu0
        %v728 = vadd.f32 %v499, %v727
        %v729 = vpop.f32.mrb[0].mxu0
        %730 = vmatprep.mubr.f32.mxu0 0.0
        %731 = vmatmul.mubr.f32.gmra.mrb[0].mxu0 %v589
        %v732 = vpop.f32.mrb[0].mxu0
        %v733 = vadd.f32 %v504, %v732
        %v734 = vpop.f32.mrb[0].mxu0
        %735 = vmatprep.mubr.f32.mxu0 0.0
        %736 = vmatmul.mubr.f32.gmra.mrb[0].mxu0 %v592
        %v737 = vpop.f32.mrb[0].mxu0
        %v738 = vadd.f32 %v509, %v737
        %v739 = vpop.f32.mrb[0].mxu0
        %740 = vmatprep.mubr.f32.mxu0 0.0
        %741 = vmatmul.mubr.f32.gmra.mrb[0].mxu0 %v595
        %v742 = vpop.f32.mrb[0].mxu0
        %v743 = vadd.f32 %v514, %v742
        %v744 = vpop.f32.mrb[0].mxu0
        %745 = vmatprep.mubr.f32.mxu0 0.0
        %746 = vmatmul.mubr.f32.gmra.mrb[0].mxu0 %v598
        %v747 = vpop.f32.mrb[0].mxu0
        %v748 = vadd.f32 %v519, %v747
        %v749 = vpop.f32.mrb[0].mxu0
        %750 = vmatprep.mubr.f32.mxu0 0.0
        %751 = vmatmul.mubr.f32.gmra.mrb[0].mxu0 %v601
        %v752 = vpop.f32.mrb[0].mxu0
        %v753 = vadd.f32 %v524, %v752
        %v754 = vpop.f32.mrb[0].mxu0
        %755 = vmatprep.mubr.f32.mxu0 0.0
        %756 = vmatmul.mubr.f32.gmra.mrb[0].mxu0 %v604
        %v757 = vpop.f32.mrb[0].mxu0
        %v758 = vadd.f32 %v529, %v757
        %v759 = vpop.f32.mrb[0].mxu0
        %760 = vmatprep.mubr.f32.mxu0 0.0
        %761 = vmatmul.mubr.f32.gmra.mrb[0].mxu0 %v607
        %v762 = vpop.f32.mrb[0].mxu0
        %v763 = vadd.f32 %v534, %v762
        %v764 = vpop.f32.mrb[0].mxu0
        %765 = vmatprep.mubr.f32.mxu0 0.0
        %766 = vmatmul.mubr.f32.gmra.mrb[0].mxu0 %v610
        %v767 = vpop.f32.mrb[0].mxu0
        %v768 = vadd.f32 %v539, %v767
        %v769 = vpop.f32.mrb[0].mxu0
        %770 = vmatprep.mubr.f32.mxu0 0.0
        %771 = vmatmul.mubr.f32.gmra.mrb[0].mxu0 %v613
        %v772 = vpop.f32.mrb[0].mxu0
        %v773 = vadd.f32 %v544, %v772
        %v774 = vpop.f32.mrb[0].mxu0
        %775 = vmatprep.mubr.f32.mxu0 0.0
        %776 = vmatmul.mubr.f32.gmra.mrb[0].mxu0 %v616
        %v777 = vpop.f32.mrb[0].mxu0
        %v778 = vadd.f32 %v549, %v777
        %v779 = vpop.f32.mrb[0].mxu0
        %780 = vmatprep.mubr.f32.mxu0 0.0
        %781 = vmatmul.mubr.f32.gmra.mrb[0].mxu0 %v619
        %v782 = vpop.f32.mrb[0].mxu0
        %v783 = vadd.f32 %v554, %v782
        %v784 = vpop.f32.mrb[0].mxu0
        %785 = vmatprep.mubr.f32.mxu0 0.0
        %786 = vmatmul.mubr.f32.gmra.mrb[0].mxu0 %v622
        %v787 = vpop.f32.mrb[0].mxu0
        %v788 = vadd.f32 %v559, %v787
        %v789 = vpop.f32.mrb[0].mxu0
        %790 = vmatprep.mubr.f32.mxu0 0.0
        %791 = vmatmul.mubr.f32.gmra.mrb[0].mxu0 %v625
        %v792 = vpop.f32.mrb[0].mxu0
        %v793 = vadd.f32 %v564, %v792
        %v794 = vpop.f32.mrb[0].mxu0
        %795 = vdwg.mxu0
        %v796 = vmax.f32 %v698, 0.0
        %v797 = vmax.f32 %v703, 0.0
        %v798 = vmax.f32 %v708, 0.0
        %v799 = vmax.f32 %v713, 0.0
        %v800 = vmax.f32 %v718, 0.0
        %v801 = vmax.f32 %v723, 0.0
        %v802 = vmax.f32 %v728, 0.0
        %v803 = vmax.f32 %v733, 0.0
        %v804 = vmax.f32 %v738, 0.0
        %v805 = vmax.f32 %v743, 0.0
        %v806 = vmax.f32 %v748, 0.0
        %v807 = vmax.f32 %v753, 0.0
        %v808 = vmax.f32 %v758, 0.0
        %v809 = vmax.f32 %v763, 0.0
        %v810 = vmax.f32 %v768, 0.0
        %v811 = vmax.f32 %v773, 0.0
        %v812 = vmax.f32 %v778, 0.0
        %v813 = vmax.f32 %v783, 0.0
        %v814 = vmax.f32 %v788, 0.0
        %v815 = vmax.f32 %v793, 0.0
        %vm820 = vcmask 1045504
        %v821 = vrot.slane %v797, 2
        %v822 = vrot.slane %v798, 2
        %v823 = vsel %vm820, %v821, %v822
        %v824 = vrot.slane %v799, 2
        %v825 = vsel %vm820, %v822, %v824
        %v826 = vrot.slane %v800, 2
        %v827 = vsel %vm820, %v824, %v826
        %v832 = vmax.f32 %v796, %v823
        %v833 = vmax.f32 %v797, %v825
        %v834 = vmax.f32 %v798, %v827
        %v835 = vmax.f32 %v799, %v826
        %v840 = vrot.slane %v802, 2
        %v841 = vrot.slane %v803, 2
        %v842 = vsel %vm820, %v840, %v841
        %v843 = vrot.slane %v804, 2
        %v844 = vsel %vm820, %v841, %v843
        %v845 = vrot.slane %v805, 2
        %v846 = vsel %vm820, %v843, %v845
        %v851 = vmax.f32 %v801, %v842
        %v852 = vmax.f32 %v802, %v844
        %v853 = vmax.f32 %v803, %v846
        %v854 = vmax.f32 %v804, %v845
        %v859 = vrot.slane %v807, 2
        %v860 = vrot.slane %v808, 2
        %v861 = vsel %vm820, %v859, %v860
        %v862 = vrot.slane %v809, 2
        %v863 = vsel %vm820, %v860, %v862
        %v864 = vrot.slane %v810, 2
        %v865 = vsel %vm820, %v862, %v864
        %v870 = vmax.f32 %v806, %v861
        %v871 = vmax.f32 %v807, %v863
        %v872 = vmax.f32 %v808, %v865
        %v873 = vmax.f32 %v809, %v864
        %v878 = vrot.slane %v812, 2
        %v879 = vrot.slane %v813, 2
        %v880 = vsel %vm820, %v878, %v879
        %v881 = vrot.slane %v814, 2
        %v882 = vsel %vm820, %v879, %v881
        %v883 = vrot.slane %v815, 2
        %v884 = vsel %vm820, %v881, %v883
        %v889 = vmax.f32 %v811, %v880
        %v890 = vmax.f32 %v812, %v882
        %v891 = vmax.f32 %v813, %v884
        %v892 = vmax.f32 %v814, %v883
        %v893 = vmax.f32 %v832, %v851
        %v894 = vmax.f32 %v833, %v852
        %v895 = vmax.f32 %v834, %v853
        %v896 = vmax.f32 %v835, %v854
        %v897 = vmax.f32 %v851, %v870
        %v898 = vmax.f32 %v852, %v871
        %v899 = vmax.f32 %v853, %v872
        %v900 = vmax.f32 %v854, %v873
        %v901 = vmax.f32 %v870, %v889
        %v902 = vmax.f32 %v871, %v890
        %v903 = vmax.f32 %v872, %v891
        %v904 = vmax.f32 %v873, %v892
        %v905 = vld [vmem:[%s3] sm:$0xff]
        %v906 = vld [vmem:[%s3 + $0x8] sm:$0xff]
        %v907 = vld [vmem:[%s3 + $0x10] sm:$0xff]
        %v908 = vld [vmem:[%s3 + $0x18] sm:$0xff]
        %v909 = vld [vmem:[%s3 + $0x20] sm:$0xff]
        %v910 = vld [vmem:[%s3 + $0x28] sm:$0xff]
        %v911 = vld [vmem:[%s3 + $0x30] sm:$0xff]
        %v912 = vld [vmem:[%s3 + $0x38] sm:$0xff]
        %v913 = vld [vmem:[%s3 + $0x40] sm:$0xff]
        %v914 = vld [vmem:[%s3 + $0x48] sm:$0xff]
        %s915 = scalar_lea.vmem %s3, 80
        %v916 = vld [vmem:[%s915] sm:$0xff]
        %v917 = vld [vmem:[%s915 + $0x8] sm:$0xff]
        %v918 = vld [vmem:[%s915 + $0x10] sm:$0xff]
        %v919 = vld [vmem:[%s915 + $0x18] sm:$0xff]
        %v920 = vld [vmem:[%s915 + $0x20] sm:$0xff]
        %v921 = vld [vmem:[%s915 + $0x28] sm:$0xff]
        %v922 = vld [vmem:[%s915 + $0x30] sm:$0xff]
        %v923 = vld [vmem:[%s915 + $0x38] sm:$0xff]
        %v924 = vld [vmem:[%s915 + $0x40] sm:$0xff]
        %v925 = vld [vmem:[%s915 + $0x48] sm:$0xff]
        %vm926 = vcmask 244736
        %v928 = vsel %vm926, %v916, 0
        %v931 = vsel %vm926, %v917, 0
        %v934 = vsel %vm926, %v918, 0
        %v937 = vsel %vm926, %v919, 0
        %v940 = vsel %vm926, %v920, 0
        %v943 = vsel %vm926, %v921, 0
        %v946 = vsel %vm926, %v922, 0
        %v949 = vsel %vm926, %v923, 0
        %v952 = vsel %vm926, %v924, 0
        %v955 = vsel %vm926, %v925, 0
        %v958 = vsel %vm820, %v900, 0
        %960 = vmatprep.subr.mxu0 0.0
        %961 = vmatpush1.msra.mxu0 %v897
        %962 = vmatprep.subr.mxu0 0.0
        %963 = vmatpush1.msra.mxu0 %v898
        %964 = vmatprep.subr.mxu0 0.0
        %965 = vmatpush1.msra.mxu0 %v899
        %966 = vmatprep.subr.mxu0 0.0
        %967 = vmatpush1.msra.mxu0 %v958
        %968 = vmatprep.subr.mxu0 0.0
        %969 = vmatpush1.msra.mxu0 0.0
        %970 = vmatprep.subr.mxu0 0.0
        %971 = vmatpush1.msra.mxu0 0.0
        %972 = vmatprep.subr.mxu0 0.0
        %973 = vmatpush1.msra.mxu0 0.0
        %974 = vmatprep.subr.mxu0 0.0
        %975 = vmatpush1.msra.mxu0 0.0
        %976 = vmatprep.subr.mxu0 0.0
        %977 = vmatpush1.msra.mxu0 0.0
        %978 = vmatprep.subr.mxu0 0.0
        %979 = vmatpush1.msra.mxu0 0.0
        %980 = vmatprep.subr.mxu0 0.0
        %981 = vmatpush1.msra.mxu0 0.0
        %982 = vmatprep.subr.mxu0 0.0
        %983 = vmatpush1.msra.mxu0 0.0
        %984 = vmatprep.subr.mxu0 0.0
        %985 = vmatpush1.msra.mxu0 0.0
        %986 = vmatprep.subr.mxu0 0.0
        %987 = vmatpush1.msra.mxu0 0.0
        %988 = vmatprep.subr.mxu0 0.0
        %989 = vmatpush1.msra.mxu0 0.0
        %990 = vmatprep.subr.mxu0 0.0
        %991 = vmatpush1.msra.mxu0 0.0
        %992 = vmatprep.subr.mxu0 0.0
        %993 = vmatpush1.msra.mxu0 0.0
        %994 = vmatprep.subr.mxu0 0.0
        %995 = vmatpush1.msra.mxu0 0.0
        %996 = vmatprep.subr.mxu0 0.0
        %997 = vmatpush1.msra.mxu0 0.0
        %998 = vmatprep.subr.mxu0 0.0
        %999 = vmatpush1.msra.mxu0 0.0
        %1000 = vmatprep.subr.mxu0 0.0
        %1001 = vmatpush1.msra.mxu0 0.0
        %1002 = vmatprep.subr.mxu0 0.0
        %1003 = vmatpush1.msra.mxu0 0.0
        %1004 = vmatprep.subr.mxu0 0.0
        %1005 = vmatpush1.msra.mxu0 0.0
        %1006 = vmatprep.subr.mxu0 0.0
        %1007 = vmatpush1.msra.mxu0 0.0
        %1008 = vmatprep.subr.mxu0 0.0
        %1009 = vmatpush1.msra.mxu0 0.0
        %1010 = vmatprep.subr.mxu0 0.0
        %1011 = vmatpush1.msra.mxu0 0.0
        %1012 = vmatprep.subr.mxu0 0.0
        %1013 = vmatpush1.msra.mxu0 0.0
        %1014 = vmatprep.subr.mxu0 0.0
        %1015 = vmatpush1.msra.mxu0 0.0
        %1016 = vmatprep.subr.mxu0 0.0
        %1017 = vmatpush1.msra.mxu0 0.0
        %1018 = vmatprep.subr.mxu0 0.0
        %1019 = vmatpush1.msra.mxu0 0.0
        %1020 = vmatprep.subr.mxu0 0.0
        %1021 = vmatpush1.msra.mxu0 0.0
        %1022 = vmatprep.subr.mxu0 0.0
        %1023 = vmatpush1.msra.mxu0 0.0
        %1024 = vmatprep.mubr.f32.mxu0 0.0
        %1025 = vmatmul.mubr.f32.gmra.mrb[0].mxu0 %v928
        %v1026 = vpop.f32.mrb[0].mxu0
        %v1027 = vadd.f32 0.0, %v1026
        %v1028 = vpop.f32.mrb[0].mxu0
        %1029 = vmatprep.mubr.f32.mxu0 0.0
        %1030 = vmatmul.mubr.f32.gmra.mrb[0].mxu0 %v931
        %v1031 = vpop.f32.mrb[0].mxu0
        %v1032 = vadd.f32 0.0, %v1031
        %v1033 = vpop.f32.mrb[0].mxu0
        %1034 = vmatprep.mubr.f32.mxu0 0.0
        %1035 = vmatmul.mubr.f32.gmra.mrb[0].mxu0 %v934
        %v1036 = vpop.f32.mrb[0].mxu0
        %v1037 = vadd.f32 0.0, %v1036
        %v1038 = vpop.f32.mrb[0].mxu0
        %1039 = vmatprep.mubr.f32.mxu0 0.0
        %1040 = vmatmul.mubr.f32.gmra.mrb[0].mxu0 %v937
        %v1041 = vpop.f32.mrb[0].mxu0
        %v1042 = vadd.f32 0.0, %v1041
        %v1043 = vpop.f32.mrb[0].mxu0
        %1044 = vmatprep.mubr.f32.mxu0 0.0
        %1045 = vmatmul.mubr.f32.gmra.mrb[0].mxu0 %v940
        %v1046 = vpop.f32.mrb[0].mxu0
        %v1047 = vadd.f32 0.0, %v1046
        %v1048 = vpop.f32.mrb[0].mxu0
        %1049 = vmatprep.mubr.f32.mxu0 0.0
        %1050 = vmatmul.mubr.f32.gmra.mrb[0].mxu0 %v943
        %v1051 = vpop.f32.mrb[0].mxu0
        %v1052 = vadd.f32 0.0, %v1051
        %v1053 = vpop.f32.mrb[0].mxu0
        %1054 = vmatprep.mubr.f32.mxu0 0.0
        %1055 = vmatmul.mubr.f32.gmra.mrb[0].mxu0 %v946
        %v1056 = vpop.f32.mrb[0].mxu0
        %v1057 = vadd.f32 0.0, %v1056
        %v1058 = vpop.f32.mrb[0].mxu0
        %1059 = vmatprep.mubr.f32.mxu0 0.0
        %1060 = vmatmul.mubr.f32.gmra.mrb[0].mxu0 %v949
        %v1061 = vpop.f32.mrb[0].mxu0
        %v1062 = vadd.f32 0.0, %v1061
        %v1063 = vpop.f32.mrb[0].mxu0
        %1064 = vmatprep.mubr.f32.mxu0 0.0
        %1065 = vmatmul.mubr.f32.gmra.mrb[0].mxu0 %v952
        %v1066 = vpop.f32.mrb[0].mxu0
        %v1067 = vadd.f32 0.0, %v1066
        %v1068 = vpop.f32.mrb[0].mxu0
        %1069 = vmatprep.mubr.f32.mxu0 0.0
        %1070 = vmatmul.mubr.f32.gmra.mrb[0].mxu0 %v955
        %v1071 = vpop.f32.mrb[0].mxu0
        %v1072 = vadd.f32 0.0, %v1071
        %v1073 = vpop.f32.mrb[0].mxu0
        %1074 = vdwg.mxu0
        %v1076 = vsel %vm926, %v905, 0
        %v1079 = vsel %vm926, %v906, 0
        %v1082 = vsel %vm926, %v907, 0
        %v1085 = vsel %vm926, %v908, 0
        %v1088 = vsel %vm926, %v909, 0
        %v1091 = vsel %vm926, %v910, 0
        %v1094 = vsel %vm926, %v911, 0
        %v1097 = vsel %vm926, %v912, 0
        %v1100 = vsel %vm926, %v913, 0
        %v1103 = vsel %vm926, %v914, 0
        %v1106 = vsel %vm820, %v896, 0
        %1108 = vmatprep.subr.mxu0 0.0
        %1109 = vmatpush1.msra.mxu0 %v893
        %1110 = vmatprep.subr.mxu0 0.0
        %1111 = vmatpush1.msra.mxu0 %v894
        %1112 = vmatprep.subr.mxu0 0.0
        %1113 = vmatpush1.msra.mxu0 %v895
        %1114 = vmatprep.subr.mxu0 0.0
        %1115 = vmatpush1.msra.mxu0 %v1106
        %1116 = vmatprep.subr.mxu0 0.0
        %1117 = vmatpush1.msra.mxu0 0.0
        %1118 = vmatprep.subr.mxu0 0.0
        %1119 = vmatpush1.msra.mxu0 0.0
        %1120 = vmatprep.subr.mxu0 0.0
        %1121 = vmatpush1.msra.mxu0 0.0
        %1122 = vmatprep.subr.mxu0 0.0
        %1123 = vmatpush1.msra.mxu0 0.0
        %1124 = vmatprep.subr.mxu0 0.0
        %1125 = vmatpush1.msra.mxu0 0.0
        %1126 = vmatprep.subr.mxu0 0.0
        %1127 = vmatpush1.msra.mxu0 0.0
        %1128 = vmatprep.subr.mxu0 0.0
        %1129 = vmatpush1.msra.mxu0 0.0
        %1130 = vmatprep.subr.mxu0 0.0
        %1131 = vmatpush1.msra.mxu0 0.0
        %1132 = vmatprep.subr.mxu0 0.0
        %1133 = vmatpush1.msra.mxu0 0.0
        %1134 = vmatprep.subr.mxu0 0.0
        %1135 = vmatpush1.msra.mxu0 0.0
        %1136 = vmatprep.subr.mxu0 0.0
        %1137 = vmatpush1.msra.mxu0 0.0
        %1138 = vmatprep.subr.mxu0 0.0
        %1139 = vmatpush1.msra.mxu0 0.0
        %1140 = vmatprep.subr.mxu0 0.0
        %1141 = vmatpush1.msra.mxu0 0.0
        %1142 = vmatprep.subr.mxu0 0.0
        %1143 = vmatpush1.msra.mxu0 0.0
        %1144 = vmatprep.subr.mxu0 0.0
        %1145 = vmatpush1.msra.mxu0 0.0
        %1146 = vmatprep.subr.mxu0 0.0
        %1147 = vmatpush1.msra.mxu0 0.0
        %1148 = vmatprep.subr.mxu0 0.0
        %1149 = vmatpush1.msra.mxu0 0.0
        %1150 = vmatprep.subr.mxu0 0.0
        %1151 = vmatpush1.msra.mxu0 0.0
        %1152 = vmatprep.subr.mxu0 0.0
        %1153 = vmatpush1.msra.mxu0 0.0
        %1154 = vmatprep.subr.mxu0 0.0
        %1155 = vmatpush1.msra.mxu0 0.0
        %1156 = vmatprep.subr.mxu0 0.0
        %1157 = vmatpush1.msra.mxu0 0.0
        %1158 = vmatprep.subr.mxu0 0.0
        %1159 = vmatpush1.msra.mxu0 0.0
        %1160 = vmatprep.subr.mxu0 0.0
        %1161 = vmatpush1.msra.mxu0 0.0
        %1162 = vmatprep.subr.mxu0 0.0
        %1163 = vmatpush1.msra.mxu0 0.0
        %1164 = vmatprep.subr.mxu0 0.0
        %1165 = vmatpush1.msra.mxu0 0.0
        %1166 = vmatprep.subr.mxu0 0.0
        %1167 = vmatpush1.msra.mxu0 0.0
        %1168 = vmatprep.subr.mxu0 0.0
        %1169 = vmatpush1.msra.mxu0 0.0
        %1170 = vmatprep.subr.mxu0 0.0
        %1171 = vmatpush1.msra.mxu0 0.0
        %1172 = vmatprep.mubr.f32.mxu0 0.0
        %1173 = vmatmul.mubr.f32.gmra.mrb[0].mxu0 %v1076
        %v1174 = vpop.f32.mrb[0].mxu0
        %v1175 = vadd.f32 %v1027, %v1174
        %v1176 = vpop.f32.mrb[0].mxu0
        %1177 = vmatprep.mubr.f32.mxu0 0.0
        %1178 = vmatmul.mubr.f32.gmra.mrb[0].mxu0 %v1079
        %v1179 = vpop.f32.mrb[0].mxu0
        %v1180 = vadd.f32 %v1032, %v1179
        %v1181 = vpop.f32.mrb[0].mxu0
        %1182 = vmatprep.mubr.f32.mxu0 0.0
        %1183 = vmatmul.mubr.f32.gmra.mrb[0].mxu0 %v1082
        %v1184 = vpop.f32.mrb[0].mxu0
        %v1185 = vadd.f32 %v1037, %v1184
        %v1186 = vpop.f32.mrb[0].mxu0
        %1187 = vmatprep.mubr.f32.mxu0 0.0
        %1188 = vmatmul.mubr.f32.gmra.mrb[0].mxu0 %v1085
        %v1189 = vpop.f32.mrb[0].mxu0
        %v1190 = vadd.f32 %v1042, %v1189
        %v1191 = vpop.f32.mrb[0].mxu0
        %1192 = vmatprep.mubr.f32.mxu0 0.0
        %1193 = vmatmul.mubr.f32.gmra.mrb[0].mxu0 %v1088
        %v1194 = vpop.f32.mrb[0].mxu0
        %v1195 = vadd.f32 %v1047, %v1194
        %v1196 = vpop.f32.mrb[0].mxu0
        %1197 = vmatprep.mubr.f32.mxu0 0.0
        %1198 = vmatmul.mubr.f32.gmra.mrb[0].mxu0 %v1091
        %v1199 = vpop.f32.mrb[0].mxu0
        %v1200 = vadd.f32 %v1052, %v1199
        %v1201 = vpop.f32.mrb[0].mxu0
        %1202 = vmatprep.mubr.f32.mxu0 0.0
        %1203 = vmatmul.mubr.f32.gmra.mrb[0].mxu0 %v1094
        %v1204 = vpop.f32.mrb[0].mxu0
        %v1205 = vadd.f32 %v1057, %v1204
        %v1206 = vpop.f32.mrb[0].mxu0
        %1207 = vmatprep.mubr.f32.mxu0 0.0
        %1208 = vmatmul.mubr.f32.gmra.mrb[0].mxu0 %v1097
        %v1209 = vpop.f32.mrb[0].mxu0
        %v1210 = vadd.f32 %v1062, %v1209
        %v1211 = vpop.f32.mrb[0].mxu0
        %1212 = vmatprep.mubr.f32.mxu0 0.0
        %1213 = vmatmul.mubr.f32.gmra.mrb[0].mxu0 %v1100
        %v1214 = vpop.f32.mrb[0].mxu0
        %v1215 = vadd.f32 %v1067, %v1214
        %v1216 = vpop.f32.mrb[0].mxu0
        %1217 = vmatprep.mubr.f32.mxu0 0.0
        %1218 = vmatmul.mubr.f32.gmra.mrb[0].mxu0 %v1103
        %v1219 = vpop.f32.mrb[0].mxu0
        %v1220 = vadd.f32 %v1072, %v1219
        %v1221 = vpop.f32.mrb[0].mxu0
        %1222 = vdwg.mxu0
        %s1223 = scalar_lea.vmem %s3, 160
        %v1224 = vld [vmem:[%s1223] sm:$0xff]
        %v1225 = vld [vmem:[%s1223 + $0x8] sm:$0xff]
        %v1226 = vld [vmem:[%s1223 + $0x10] sm:$0xff]
        %v1227 = vld [vmem:[%s1223 + $0x18] sm:$0xff]
        %v1228 = vld [vmem:[%s1223 + $0x20] sm:$0xff]
        %v1229 = vld [vmem:[%s1223 + $0x28] sm:$0xff]
        %v1230 = vld [vmem:[%s1223 + $0x30] sm:$0xff]
        %v1231 = vld [vmem:[%s1223 + $0x38] sm:$0xff]
        %v1232 = vld [vmem:[%s1223 + $0x40] sm:$0xff]
        %v1233 = vld [vmem:[%s1223 + $0x48] sm:$0xff]
        %v1235 = vsel %vm926, %v1224, 0
        %v1238 = vsel %vm926, %v1225, 0
        %v1241 = vsel %vm926, %v1226, 0
        %v1244 = vsel %vm926, %v1227, 0
        %v1247 = vsel %vm926, %v1228, 0
        %v1250 = vsel %vm926, %v1229, 0
        %v1253 = vsel %vm926, %v1230, 0
        %v1256 = vsel %vm926, %v1231, 0
        %v1259 = vsel %vm926, %v1232, 0
        %v1262 = vsel %vm926, %v1233, 0
        %v1265 = vsel %vm820, %v904, 0
        %1267 = vmatprep.subr.mxu0 0.0
        %1268 = vmatpush1.msra.mxu0 %v901
        %1269 = vmatprep.subr.mxu0 0.0
        %1270 = vmatpush1.msra.mxu0 %v902
        %1271 = vmatprep.subr.mxu0 0.0
        %1272 = vmatpush1.msra.mxu0 %v903
        %1273 = vmatprep.subr.mxu0 0.0
        %1274 = vmatpush1.msra.mxu0 %v1265
        %1275 = vmatprep.subr.mxu0 0.0
        %1276 = vmatpush1.msra.mxu0 0.0
        %1277 = vmatprep.subr.mxu0 0.0
        %1278 = vmatpush1.msra.mxu0 0.0
        %1279 = vmatprep.subr.mxu0 0.0
        %1280 = vmatpush1.msra.mxu0 0.0
        %1281 = vmatprep.subr.mxu0 0.0
        %1282 = vmatpush1.msra.mxu0 0.0
        %1283 = vmatprep.subr.mxu0 0.0
        %1284 = vmatpush1.msra.mxu0 0.0
        %1285 = vmatprep.subr.mxu0 0.0
        %1286 = vmatpush1.msra.mxu0 0.0
        %1287 = vmatprep.subr.mxu0 0.0
        %1288 = vmatpush1.msra.mxu0 0.0
        %1289 = vmatprep.subr.mxu0 0.0
        %1290 = vmatpush1.msra.mxu0 0.0
        %1291 = vmatprep.subr.mxu0 0.0
        %1292 = vmatpush1.msra.mxu0 0.0
        %1293 = vmatprep.subr.mxu0 0.0
        %1294 = vmatpush1.msra.mxu0 0.0
        %1295 = vmatprep.subr.mxu0 0.0
        %1296 = vmatpush1.msra.mxu0 0.0
        %1297 = vmatprep.subr.mxu0 0.0
        %1298 = vmatpush1.msra.mxu0 0.0
        %1299 = vmatprep.subr.mxu0 0.0
        %1300 = vmatpush1.msra.mxu0 0.0
        %1301 = vmatprep.subr.mxu0 0.0
        %1302 = vmatpush1.msra.mxu0 0.0
        %1303 = vmatprep.subr.mxu0 0.0
        %1304 = vmatpush1.msra.mxu0 0.0
        %1305 = vmatprep.subr.mxu0 0.0
        %1306 = vmatpush1.msra.mxu0 0.0
        %1307 = vmatprep.subr.mxu0 0.0
        %1308 = vmatpush1.msra.mxu0 0.0
        %1309 = vmatprep.subr.mxu0 0.0
        %1310 = vmatpush1.msra.mxu0 0.0
        %1311 = vmatprep.subr.mxu0 0.0
        %1312 = vmatpush1.msra.mxu0 0.0
        %1313 = vmatprep.subr.mxu0 0.0
        %1314 = vmatpush1.msra.mxu0 0.0
        %1315 = vmatprep.subr.mxu0 0.0
        %1316 = vmatpush1.msra.mxu0 0.0
        %1317 = vmatprep.subr.mxu0 0.0
        %1318 = vmatpush1.msra.mxu0 0.0
        %1319 = vmatprep.subr.mxu0 0.0
        %1320 = vmatpush1.msra.mxu0 0.0
        %1321 = vmatprep.subr.mxu0 0.0
        %1322 = vmatpush1.msra.mxu0 0.0
        %1323 = vmatprep.subr.mxu0 0.0
        %1324 = vmatpush1.msra.mxu0 0.0
        %1325 = vmatprep.subr.mxu0 0.0
        %1326 = vmatpush1.msra.mxu0 0.0
        %1327 = vmatprep.subr.mxu0 0.0
        %1328 = vmatpush1.msra.mxu0 0.0
        %1329 = vmatprep.subr.mxu0 0.0
        %1330 = vmatpush1.msra.mxu0 0.0
        %1331 = vmatprep.mubr.f32.mxu0 0.0
        %1332 = vmatmul.mubr.f32.gmra.mrb[0].mxu0 %v1235
        %v1333 = vpop.f32.mrb[0].mxu0
        %v1334 = vadd.f32 0.0, %v1333
        %v1335 = vpop.f32.mrb[0].mxu0
        %1336 = vmatprep.mubr.f32.mxu0 0.0
        %1337 = vmatmul.mubr.f32.gmra.mrb[0].mxu0 %v1238
        %v1338 = vpop.f32.mrb[0].mxu0
        %v1339 = vadd.f32 0.0, %v1338
        %v1340 = vpop.f32.mrb[0].mxu0
        %1341 = vmatprep.mubr.f32.mxu0 0.0
        %1342 = vmatmul.mubr.f32.gmra.mrb[0].mxu0 %v1241
        %v1343 = vpop.f32.mrb[0].mxu0
        %v1344 = vadd.f32 0.0, %v1343
        %v1345 = vpop.f32.mrb[0].mxu0
        %1346 = vmatprep.mubr.f32.mxu0 0.0
        %1347 = vmatmul.mubr.f32.gmra.mrb[0].mxu0 %v1244
        %v1348 = vpop.f32.mrb[0].mxu0
        %v1349 = vadd.f32 0.0, %v1348
        %v1350 = vpop.f32.mrb[0].mxu0
        %1351 = vmatprep.mubr.f32.mxu0 0.0
        %1352 = vmatmul.mubr.f32.gmra.mrb[0].mxu0 %v1247
        %v1353 = vpop.f32.mrb[0].mxu0
        %v1354 = vadd.f32 0.0, %v1353
        %v1355 = vpop.f32.mrb[0].mxu0
        %1356 = vmatprep.mubr.f32.mxu0 0.0
        %1357 = vmatmul.mubr.f32.gmra.mrb[0].mxu0 %v1250
        %v1358 = vpop.f32.mrb[0].mxu0
        %v1359 = vadd.f32 0.0, %v1358
        %v1360 = vpop.f32.mrb[0].mxu0
        %1361 = vmatprep.mubr.f32.mxu0 0.0
        %1362 = vmatmul.mubr.f32.gmra.mrb[0].mxu0 %v1253
        %v1363 = vpop.f32.mrb[0].mxu0
        %v1364 = vadd.f32 0.0, %v1363
        %v1365 = vpop.f32.mrb[0].mxu0
        %1366 = vmatprep.mubr.f32.mxu0 0.0
        %1367 = vmatmul.mubr.f32.gmra.mrb[0].mxu0 %v1256
        %v1368 = vpop.f32.mrb[0].mxu0
        %v1369 = vadd.f32 0.0, %v1368
        %v1370 = vpop.f32.mrb[0].mxu0
        %1371 = vmatprep.mubr.f32.mxu0 0.0
        %1372 = vmatmul.mubr.f32.gmra.mrb[0].mxu0 %v1259
        %v1373 = vpop.f32.mrb[0].mxu0
        %v1374 = vadd.f32 0.0, %v1373
        %v1375 = vpop.f32.mrb[0].mxu0
        %1376 = vmatprep.mubr.f32.mxu0 0.0
        %1377 = vmatmul.mubr.f32.gmra.mrb[0].mxu0 %v1262
        %v1378 = vpop.f32.mrb[0].mxu0
        %v1379 = vadd.f32 0.0, %v1378
        %v1380 = vpop.f32.mrb[0].mxu0
        %1381 = vdwg.mxu0
        %v1382 = vadd.f32 %v1175, %v1334
        %v1383 = vadd.f32 %v1180, %v1339
        %v1384 = vadd.f32 %v1185, %v1344
        %v1385 = vadd.f32 %v1190, %v1349
        %v1386 = vadd.f32 %v1195, %v1354
        %v1387 = vadd.f32 %v1200, %v1359
        %v1388 = vadd.f32 %v1205, %v1364
        %v1389 = vadd.f32 %v1210, %v1369
        %v1390 = vadd.f32 %v1215, %v1374
        %v1391 = vadd.f32 %v1220, %v1379
        %v1392 = vld [vmem:[%s4] sm:$0xff]
        %v1393 = vld [vmem:[%s4 + $0x8] sm:$0xff]
        %v1394 = vld [vmem:[%s4 + $0x10] sm:$0xff]
        %v1395 = vld [vmem:[%s4 + $0x18] sm:$0xff]
        %v1396 = vld [vmem:[%s4 + $0x20] sm:$0xff]
        %v1397 = vld [vmem:[%s4 + $0x28] sm:$0xff]
        %v1398 = vld [vmem:[%s4 + $0x30] sm:$0xff]
        %v1399 = vld [vmem:[%s4 + $0x38] sm:$0xff]
        %v1400 = vld [vmem:[%s4 + $0x40] sm:$0xff]
        %v1401 = vld [vmem:[%s4 + $0x48] sm:$0xff]
        %1403 = vset.pattern.permute.xlu0 0
        %1404 = vperm.xlu0 %1403, %v1392
        %v1405 = vpop.permute.xlu0 %1404
        %1408 = vset.pattern.permute.xlu0 0
        %1409 = vperm.xlu0 %1408, %v1393
        %v1410 = vpop.permute.xlu0 %1409
        %1413 = vset.pattern.permute.xlu0 0
        %1414 = vperm.xlu0 %1413, %v1394
        %v1415 = vpop.permute.xlu0 %1414
        %1418 = vset.pattern.permute.xlu0 0
        %1419 = vperm.xlu0 %1418, %v1395
        %v1420 = vpop.permute.xlu0 %1419
        %1423 = vset.pattern.permute.xlu0 0
        %1424 = vperm.xlu0 %1423, %v1396
        %v1425 = vpop.permute.xlu0 %1424
        %1428 = vset.pattern.permute.xlu0 0
        %1429 = vperm.xlu0 %1428, %v1397
        %v1430 = vpop.permute.xlu0 %1429
        %1433 = vset.pattern.permute.xlu0 0
        %1434 = vperm.xlu0 %1433, %v1398
        %v1435 = vpop.permute.xlu0 %1434
        %1438 = vset.pattern.permute.xlu0 0
        %1439 = vperm.xlu0 %1438, %v1399
        %v1440 = vpop.permute.xlu0 %1439
        %1443 = vset.pattern.permute.xlu0 0
        %1444 = vperm.xlu0 %1443, %v1400
        %v1445 = vpop.permute.xlu0 %1444
        %1448 = vset.pattern.permute.xlu0 0
        %1449 = vperm.xlu0 %1448, %v1401
        %v1450 = vpop.permute.xlu0 %1449
        %v1452 = vadd.f32 %v1382, %v1405
        %v1453 = vadd.f32 %v1383, %v1410
        %v1454 = vadd.f32 %v1384, %v1415
        %v1455 = vadd.f32 %v1385, %v1420
        %v1456 = vadd.f32 %v1386, %v1425
        %v1457 = vadd.f32 %v1387, %v1430
        %v1458 = vadd.f32 %v1388, %v1435
        %v1459 = vadd.f32 %v1389, %v1440
        %v1460 = vadd.f32 %v1390, %v1445
        %v1461 = vadd.f32 %v1391, %v1450
        %v1462 = vmax.f32 %v1452, 0.0
        %v1463 = vmax.f32 %v1453, 0.0
        %v1464 = vmax.f32 %v1454, 0.0
        %v1465 = vmax.f32 %v1455, 0.0
        %v1466 = vmax.f32 %v1456, 0.0
        %v1467 = vmax.f32 %v1457, 0.0
        %v1468 = vmax.f32 %v1458, 0.0
        %v1469 = vmax.f32 %v1459, 0.0
        %v1470 = vmax.f32 %v1460, 0.0
        %v1471 = vmax.f32 %v1461, 0.0
        %v1472 = vld [vmem:[%s5] sm:$0xff]
        %v1473 = vld [vmem:[%s5 + $0x8] sm:$0xff]
        %v1474 = vld [vmem:[%s5 + $0x10] sm:$0xff]
        %v1475 = vld [vmem:[%s5 + $0x18] sm:$0xff]
        %v1476 = vld [vmem:[%s5 + $0x20] sm:$0xff]
        %v1477 = vld [vmem:[%s5 + $0x28] sm:$0xff]
        %v1478 = vld [vmem:[%s5 + $0x30] sm:$0xff]
        %v1479 = vld [vmem:[%s5 + $0x38] sm:$0xf]
        %v1480 = vld [vmem:[%s6] sm:$0xff]
        %v1481 = vld [vmem:[%s6 + $0x8] sm:$0xff]
        %v1482 = vld [vmem:[%s6 + $0x10] sm:$0xff]
        %v1483 = vld [vmem:[%s6 + $0x18] sm:$0xff]
        %v1484 = vld [vmem:[%s6 + $0x20] sm:$0xff]
        %v1485 = vld [vmem:[%s6 + $0x28] sm:$0xff]
        %v1486 = vld [vmem:[%s6 + $0x30] sm:$0xff]
        %v1487 = vld [vmem:[%s6 + $0x38] sm:$0xf]
        %1489 = vset.pattern.permute.xlu0 0
        %1490 = vperm.xlu0 %1489, %v1480
        %v1491 = vpop.permute.xlu0 %1490
        %1494 = vset.pattern.permute.xlu0 0
        %1495 = vperm.xlu0 %1494, %v1481
        %v1496 = vpop.permute.xlu0 %1495
        %1499 = vset.pattern.permute.xlu0 0
        %1500 = vperm.xlu0 %1499, %v1482
        %v1501 = vpop.permute.xlu0 %1500
        %1504 = vset.pattern.permute.xlu0 0
        %1505 = vperm.xlu0 %1504, %v1483
        %v1506 = vpop.permute.xlu0 %1505
        %1509 = vset.pattern.permute.xlu0 0
        %1510 = vperm.xlu0 %1509, %v1484
        %v1511 = vpop.permute.xlu0 %1510
        %1514 = vset.pattern.permute.xlu0 0
        %1515 = vperm.xlu0 %1514, %v1485
        %v1516 = vpop.permute.xlu0 %1515
        %1519 = vset.pattern.permute.xlu0 0
        %1520 = vperm.xlu0 %1519, %v1486
        %v1521 = vpop.permute.xlu0 %1520
        %1524 = vset.pattern.permute.xlu0 0
        %1525 = vperm.xlu0 %1524, %v1487
        %v1526 = vpop.permute.xlu0 %1525
        %vm1528 = vcmask 654336
        %v1530 = vsel %vm1528, %v1472, 0
        %v1533 = vsel %vm1528, %v1473, 0
        %v1536 = vsel %vm1528, %v1474, 0
        %v1539 = vsel %vm1528, %v1475, 0
        %v1542 = vsel %vm1528, %v1476, 0
        %v1545 = vsel %vm1528, %v1477, 0
        %v1548 = vsel %vm1528, %v1478, 0
        %v1551 = vsel %vm1528, %v1479, 0
        %1553 = vmatprep.subr.mxu0 0.0
        %1554 = vmatpush1.msra.mxu0 %v1462
        %1555 = vmatprep.subr.mxu0 0.0
        %1556 = vmatpush1.msra.mxu0 %v1463
        %1557 = vmatprep.subr.mxu0 0.0
        %1558 = vmatpush1.msra.mxu0 %v1464
        %1559 = vmatprep.subr.mxu0 0.0
        %1560 = vmatpush1.msra.mxu0 %v1465
        %1561 = vmatprep.subr.mxu0 0.0
        %1562 = vmatpush1.msra.mxu0 %v1466
        %1563 = vmatprep.subr.mxu0 0.0
        %1564 = vmatpush1.msra.mxu0 %v1467
        %1565 = vmatprep.subr.mxu0 0.0
        %1566 = vmatpush1.msra.mxu0 %v1468
        %1567 = vmatprep.subr.mxu0 0.0
        %1568 = vmatpush1.msra.mxu0 %v1469
        %1569 = vmatprep.subr.mxu0 0.0
        %1570 = vmatpush1.msra.mxu0 %v1470
        %1571 = vmatprep.subr.mxu0 0.0
        %1572 = vmatpush1.msra.mxu0 %v1471
        %1573 = vmatprep.subr.mxu0 0.0
        %1574 = vmatpush1.msra.mxu0 0.0
        %1575 = vmatprep.subr.mxu0 0.0
        %1576 = vmatpush1.msra.mxu0 0.0
        %1577 = vmatprep.subr.mxu0 0.0
        %1578 = vmatpush1.msra.mxu0 0.0
        %1579 = vmatprep.subr.mxu0 0.0
        %1580 = vmatpush1.msra.mxu0 0.0
        %1581 = vmatprep.subr.mxu0 0.0
        %1582 = vmatpush1.msra.mxu0 0.0
        %1583 = vmatprep.subr.mxu0 0.0
        %1584 = vmatpush1.msra.mxu0 0.0
        %1585 = vmatprep.subr.mxu0 0.0
        %1586 = vmatpush1.msra.mxu0 0.0
        %1587 = vmatprep.subr.mxu0 0.0
        %1588 = vmatpush1.msra.mxu0 0.0
        %1589 = vmatprep.subr.mxu0 0.0
        %1590 = vmatpush1.msra.mxu0 0.0
        %1591 = vmatprep.subr.mxu0 0.0
        %1592 = vmatpush1.msra.mxu0 0.0
        %1593 = vmatprep.subr.mxu0 0.0
        %1594 = vmatpush1.msra.mxu0 0.0
        %1595 = vmatprep.subr.mxu0 0.0
        %1596 = vmatpush1.msra.mxu0 0.0
        %1597 = vmatprep.subr.mxu0 0.0
        %1598 = vmatpush1.msra.mxu0 0.0
        %1599 = vmatprep.subr.mxu0 0.0
        %1600 = vmatpush1.msra.mxu0 0.0
        %1601 = vmatprep.subr.mxu0 0.0
        %1602 = vmatpush1.msra.mxu0 0.0
        %1603 = vmatprep.subr.mxu0 0.0
        %1604 = vmatpush1.msra.mxu0 0.0
        %1605 = vmatprep.subr.mxu0 0.0
        %1606 = vmatpush1.msra.mxu0 0.0
        %1607 = vmatprep.subr.mxu0 0.0
        %1608 = vmatpush1.msra.mxu0 0.0
        %1609 = vmatprep.subr.mxu0 0.0
        %1610 = vmatpush1.msra.mxu0 0.0
        %1611 = vmatprep.subr.mxu0 0.0
        %1612 = vmatpush1.msra.mxu0 0.0
        %1613 = vmatprep.subr.mxu0 0.0
        %1614 = vmatpush1.msra.mxu0 0.0
        %1615 = vmatprep.subr.mxu0 0.0
        %1616 = vmatpush1.msra.mxu0 0.0
        %1617 = vmatprep.mubr.f32.mxu0 0.0
        %1618 = vmatmul.mubr.f32.gmra.mrb[0].mxu0 %v1530
        %v1619 = vpop.f32.mrb[0].mxu0
        %v1620 = vadd.f32 %v1491, %v1619
        %v1621 = vpop.f32.mrb[0].mxu0
        %1622 = vmatprep.mubr.f32.mxu0 0.0
        %1623 = vmatmul.mubr.f32.gmra.mrb[0].mxu0 %v1533
        %v1624 = vpop.f32.mrb[0].mxu0
        %v1625 = vadd.f32 %v1496, %v1624
        %v1626 = vpop.f32.mrb[0].mxu0
        %1627 = vmatprep.mubr.f32.mxu0 0.0
        %1628 = vmatmul.mubr.f32.gmra.mrb[0].mxu0 %v1536
        %v1629 = vpop.f32.mrb[0].mxu0
        %v1630 = vadd.f32 %v1501, %v1629
        %v1631 = vpop.f32.mrb[0].mxu0
        %1632 = vmatprep.mubr.f32.mxu0 0.0
        %1633 = vmatmul.mubr.f32.gmra.mrb[0].mxu0 %v1539
        %v1634 = vpop.f32.mrb[0].mxu0
        %v1635 = vadd.f32 %v1506, %v1634
        %v1636 = vpop.f32.mrb[0].mxu0
        %1637 = vmatprep.mubr.f32.mxu0 0.0
        %1638 = vmatmul.mubr.f32.gmra.mrb[0].mxu0 %v1542
        %v1639 = vpop.f32.mrb[0].mxu0
        %v1640 = vadd.f32 %v1511, %v1639
        %v1641 = vpop.f32.mrb[0].mxu0
        %1642 = vmatprep.mubr.f32.mxu0 0.0
        %1643 = vmatmul.mubr.f32.gmra.mrb[0].mxu0 %v1545
        %v1644 = vpop.f32.mrb[0].mxu0
        %v1645 = vadd.f32 %v1516, %v1644
        %v1646 = vpop.f32.mrb[0].mxu0
        %1647 = vmatprep.mubr.f32.mxu0 0.0
        %1648 = vmatmul.mubr.f32.gmra.mrb[0].mxu0 %v1548
        %v1649 = vpop.f32.mrb[0].mxu0
        %v1650 = vadd.f32 %v1521, %v1649
        %v1651 = vpop.f32.mrb[0].mxu0
        %1652 = vmatprep.mubr.f32.mxu0 0.0
        %1653 = vmatmul.mubr.f32.gmra.mrb[0].mxu0 %v1551
        %v1654 = vpop.f32.mrb[0].mxu0
        %v1655 = vadd.f32 %v1526, %v1654
        %v1656 = vpop.f32.mrb[0].mxu0
        %1657 = vdwg.mxu0
        %v1658 = vmax.f32 %v1620, 0.0
        %v1659 = vmax.f32 %v1625, 0.0
        %v1660 = vmax.f32 %v1630, 0.0
        %v1661 = vmax.f32 %v1635, 0.0
        %v1662 = vmax.f32 %v1640, 0.0
        %v1663 = vmax.f32 %v1645, 0.0
        %v1664 = vmax.f32 %v1650, 0.0
        %v1665 = vmax.f32 %v1655, 0.0
        %v1666 = vld [vmem:[%s7] sm:$0xff]
        %v1667 = vld [vmem:[%s7 + $0x8] sm:$0xff]
        %v1668 = vld [vmem:[%s7 + $0x10] sm:$0xff]
        %v1669 = vld [vmem:[%s7 + $0x18] sm:$0xff]
        %v1670 = vld [vmem:[%s7 + $0x20] sm:$0xff]
        %v1671 = vld [vmem:[%s8] sm:$0xff]
        %v1672 = vld [vmem:[%s8 + $0x8] sm:$0xff]
        %v1673 = vld [vmem:[%s8 + $0x10] sm:$0xff]
        %v1674 = vld [vmem:[%s8 + $0x18] sm:$0xff]
        %v1675 = vld [vmem:[%s8 + $0x20] sm:$0xff]
        %1677 = vset.pattern.permute.xlu0 0
        %1678 = vperm.xlu0 %1677, %v1671
        %v1679 = vpop.permute.xlu0 %1678
        %1682 = vset.pattern.permute.xlu0 0
        %1683 = vperm.xlu0 %1682, %v1672
        %v1684 = vpop.permute.xlu0 %1683
        %1687 = vset.pattern.permute.xlu0 0
        %1688 = vperm.xlu0 %1687, %v1673
        %v1689 = vpop.permute.xlu0 %1688
        %1692 = vset.pattern.permute.xlu0 0
        %1693 = vperm.xlu0 %1692, %v1674
        %v1694 = vpop.permute.xlu0 %1693
        %1697 = vset.pattern.permute.xlu0 0
        %1698 = vperm.xlu0 %1697, %v1675
        %v1699 = vpop.permute.xlu0 %1698
        %vm1701 = vcmask 490496
        %v1703 = vsel %vm1701, %v1666, 0
        %v1706 = vsel %vm1701, %v1667, 0
        %v1709 = vsel %vm1701, %v1668, 0
        %v1712 = vsel %vm1701, %v1669, 0
        %v1715 = vsel %vm1701, %v1670, 0
        %v1718 = vsel %vm627, %v1665, 0
        %1720 = vmatprep.subr.mxu0 0.0
        %1721 = vmatpush1.msra.mxu0 %v1658
        %1722 = vmatprep.subr.mxu0 0.0
        %1723 = vmatpush1.msra.mxu0 %v1659
        %1724 = vmatprep.subr.mxu0 0.0
        %1725 = vmatpush1.msra.mxu0 %v1660
        %1726 = vmatprep.subr.mxu0 0.0
        %1727 = vmatpush1.msra.mxu0 %v1661
        %1728 = vmatprep.subr.mxu0 0.0
        %1729 = vmatpush1.msra.mxu0 %v1662
        %1730 = vmatprep.subr.mxu0 0.0
        %1731 = vmatpush1.msra.mxu0 %v1663
        %1732 = vmatprep.subr.mxu0 0.0
        %1733 = vmatpush1.msra.mxu0 %v1664
        %1734 = vmatprep.subr.mxu0 0.0
        %1735 = vmatpush1.msra.mxu0 %v1718
        %1736 = vmatprep.subr.mxu0 0.0
        %1737 = vmatpush1.msra.mxu0 0.0
        %1738 = vmatprep.subr.mxu0 0.0
        %1739 = vmatpush1.msra.mxu0 0.0
        %1740 = vmatprep.subr.mxu0 0.0
        %1741 = vmatpush1.msra.mxu0 0.0
        %1742 = vmatprep.subr.mxu0 0.0
        %1743 = vmatpush1.msra.mxu0 0.0
        %1744 = vmatprep.subr.mxu0 0.0
        %1745 = vmatpush1.msra.mxu0 0.0
        %1746 = vmatprep.subr.mxu0 0.0
        %1747 = vmatpush1.msra.mxu0 0.0
        %1748 = vmatprep.subr.mxu0 0.0
        %1749 = vmatpush1.msra.mxu0 0.0
        %1750 = vmatprep.subr.mxu0 0.0
        %1751 = vmatpush1.msra.mxu0 0.0
        %1752 = vmatprep.subr.mxu0 0.0
        %1753 = vmatpush1.msra.mxu0 0.0
        %1754 = vmatprep.subr.mxu0 0.0
        %1755 = vmatpush1.msra.mxu0 0.0
        %1756 = vmatprep.subr.mxu0 0.0
        %1757 = vmatpush1.msra.mxu0 0.0
        %1758 = vmatprep.subr.mxu0 0.0
        %1759 = vmatpush1.msra.mxu0 0.0
        %1760 = vmatprep.subr.mxu0 0.0
        %1761 = vmatpush1.msra.mxu0 0.0
        %1762 = vmatprep.subr.mxu0 0.0
        %1763 = vmatpush1.msra.mxu0 0.0
        %1764 = vmatprep.subr.mxu0 0.0
        %1765 = vmatpush1.msra.mxu0 0.0
        %1766 = vmatprep.subr.mxu0 0.0
        %1767 = vmatpush1.msra.mxu0 0.0
        %1768 = vmatprep.subr.mxu0 0.0
        %1769 = vmatpush1.msra.mxu0 0.0
        %1770 = vmatprep.subr.mxu0 0.0
        %1771 = vmatpush1.msra.mxu0 0.0
        %1772 = vmatprep.subr.mxu0 0.0
        %1773 = vmatpush1.msra.mxu0 0.0
        %1774 = vmatprep.subr.mxu0 0.0
        %1775 = vmatpush1.msra.mxu0 0.0
        %1776 = vmatprep.subr.mxu0 0.0
        %1777 = vmatpush1.msra.mxu0 0.0
        %1778 = vmatprep.subr.mxu0 0.0
        %1779 = vmatpush1.msra.mxu0 0.0
        %1780 = vmatprep.subr.mxu0 0.0
        %1781 = vmatpush1.msra.mxu0 0.0
        %1782 = vmatprep.subr.mxu0 0.0
        %1783 = vmatpush1.msra.mxu0 0.0
        %1784 = vmatprep.mubr.f32.mxu0 0.0
        %1785 = vmatmul.mubr.f32.gmra.mrb[0].mxu0 %v1703
        %v1786 = vpop.f32.mrb[0].mxu0
        %v1787 = vadd.f32 %v1679, %v1786
        %v1788 = vpop.f32.mrb[0].mxu0
        %1789 = vmatprep.mubr.f32.mxu0 0.0
        %1790 = vmatmul.mubr.f32.gmra.mrb[0].mxu0 %v1706
        %v1791 = vpop.f32.mrb[0].mxu0
        %v1792 = vadd.f32 %v1684, %v1791
        %v1793 = vpop.f32.mrb[0].mxu0
        %1794 = vmatprep.mubr.f32.mxu0 0.0
        %1795 = vmatmul.mubr.f32.gmra.mrb[0].mxu0 %v1709
        %v1796 = vpop.f32.mrb[0].mxu0
        %v1797 = vadd.f32 %v1689, %v1796
        %v1798 = vpop.f32.mrb[0].mxu0
        %1799 = vmatprep.mubr.f32.mxu0 0.0
        %1800 = vmatmul.mubr.f32.gmra.mrb[0].mxu0 %v1712
        %v1801 = vpop.f32.mrb[0].mxu0
        %v1802 = vadd.f32 %v1694, %v1801
        %v1803 = vpop.f32.mrb[0].mxu0
        %1804 = vmatprep.mubr.f32.mxu0 0.0
        %1805 = vmatmul.mubr.f32.gmra.mrb[0].mxu0 %v1715
        %v1806 = vpop.f32.mrb[0].mxu0
        %v1807 = vadd.f32 %v1699, %v1806
        %v1808 = vpop.f32.mrb[0].mxu0
        %1809 = vdwg.mxu0
        %v1810 = vmax.f32 %v1787, %v1807
        %v1811 = vmax.f32 %v1810, %v1792
        %v1812 = vmax.f32 %v1797, %v1802
        %v1813 = vmax.f32 %v1811, %v1812
        %v1814 = vrot.slane %v1813, 4
        %v1815 = vmax.f32 %v1813, %v1814
        %v1816 = vrot.slane %v1815, 2
        %v1817 = vmax.f32 %v1815, %v1816
        %v1818 = vrot.slane %v1817, 1
        %v1819 = vmax.f32 %v1817, %v1818
        %v1820 = vsub.f32 %v1787, %v1819
        %v1821 = vsub.f32 %v1792, %v1819
        %v1822 = vsub.f32 %v1797, %v1819
        %v1823 = vsub.f32 %v1802, %v1819
        %v1824 = vsub.f32 %v1807, %v1819
        %v1825 = vmul.f32 %v1820, 1.442695
        %v1826 = vpow.pop %v1825
        %v1827 = vmul.f32 %v1821, 1.442695
        %v1828 = vpow.pop %v1827
        %v1829 = vmul.f32 %v1822, 1.442695
        %v1830 = vpow.pop %v1829
        %v1831 = vmul.f32 %v1823, 1.442695
        %v1832 = vpow.pop %v1831
        %v1833 = vmul.f32 %v1824, 1.442695
        %v1834 = vpow.pop %v1833
        %v1835 = vadd.f32 %v1826, %v1828
        %v1836 = vadd.f32 %v1835, %v1830
        %v1837 = vadd.f32 %v1836, %v1832
        %v1838 = vadd.f32 %v1837, %v1834
        %v1839 = vrot.slane %v1838, 4
        %v1840 = vadd.f32 %v1838, %v1839
        %v1841 = vrot.slane %v1840, 2
        %v1842 = vadd.f32 %v1840, %v1841
        %v1843 = vrot.slane %v1842, 1
        %v1844 = vadd.f32 %v1842, %v1843
        %v1845 = vlog2.pop %v1844
        %v1846 = vmul.f32 %v1845, 0.6931472
        %v1847 = vsub.f32 %v1820, %v1846
        %v1848 = vsub.f32 %v1821, %v1846
        %v1849 = vsub.f32 %v1822, %v1846
        %v1850 = vsub.f32 %v1823, %v1846
        %v1851 = vsub.f32 %v1824, %v1846
        %1852 = vst [vmem:[%s412] sm:$0xff] %v1847
        %1853 = vst [vmem:[%s412 + $0x8] sm:$0xff] %v1848
        %1854 = vst [vmem:[%s412 + $0x10] sm:$0xff] %v1849
        %1855 = vst [vmem:[%s412 + $0x18] sm:$0xff] %v1850
        %1856 = vst [vmem:[%s412 + $0x20] sm:$0xff] %v1851
        %s1857 = sand.u32 %s225, 1
        %s1858 = scalar_lea.sflag [#allocation4], %s1857
        %s1859 = sand.u32 %s225, 1
        %s1860 = smul.addr %s1859, 40
        %s1861 = scalar_lea.vmem [#allocation3], %s1860
        // Predicated region
        $region95: #{cnn_forward.1} parent=89 // pred_check
          %p1862 = pneg %p235
        $region96: #{cnn_forward.1} parent=89 // pred_check_branch
          %1864 = sbr.rel (%p1862) target = $region98
        $region97: #{cnn_forward.1} parent=89 // pred_region
          %s1866 = ssub.s32 640, 640
          %1867 = vsyncadd %s1858, %s1866
          %s1868 = smul.addr %s23, 128
          %s1869 = scalar_lea.hbm %s9, %s1868
          %s1870 = sshll.u32 %s1861, 4
          %s1871 = int_to_ptr.vmem [resolvable:$true] %s1870
          %1876 = dma.vmem_to_hbm [thread:$0]  %s1871, 640, %s1869, %s1858, 128, 256, 8
        $region98: #{cnn_forward.1} parent=89 // pred_fallthru
          _
      $region90: #{cnn_forward.1} parent=5 // pred_fallthru
        _
      %p1877 = scmp.le.s32.totalorder 2, %s18
      // Predicated region
      $region99: #{cnn_forward.1} parent=5 // pred_check
        %p1878 = pneg %p1877
      $region100: #{cnn_forward.1} parent=5 // pred_check_branch
        %1880 = sbr.rel (%p1878) target = $region102
      $region101: #{cnn_forward.1} parent=5 // pred_region
        %s1881 = ssub.s32 %s18, 2
        // Predicated region
        $region103: #{cnn_forward.1} parent=101 // pred_check
          %p1882 = pneg %p241
        $region104: #{cnn_forward.1} parent=101 // pred_check_branch
          %1884 = sbr.rel (%p1882) target = $region106
        $region105: #{cnn_forward.1} parent=101 // pred_region
          %s1885 = sand.u32 %s226, 1
          %s1886 = scalar_lea.sflag [#allocation4], %s1885
          %s1887 = sand.u32 %s226, 1
          %s1888 = smul.addr %s1887, 40
          %s1889 = scalar_lea.vmem [#allocation3], %s1888
          %1890 = dma.done %s1886, 640
        $region106: #{cnn_forward.1} parent=101 // pred_fallthru
          _
      $region102: #{cnn_forward.1} parent=5 // pred_fallthru
        _
    $region6: #{cnn_forward.1} parent=1 // loop_footer
      %s22 = sadd.s32 1, %s18
    $region7: #{cnn_forward.1} parent=1 // loop_footer_branch
      %17 = sbr.rel target = $region3
    $region8: #{cnn_forward.1} parent=1 // loop_exit
      _
    %1891 = vsyncpa [#allocation4], 1
    %s1892 = scalar_lea.sflag [#allocation4], 1
    %1893 = vsyncpa %s1892, 1

</llo_original>
